<compile_context>
chip_gen: v6e
topology: v6e:2x2x1
jax: 0.10.0
libtpu: 0.0.40
codegen_flags: <defaults>
</compile_context>

<pallas_src>
import jax
import jax.numpy as jnp
from jax import lax
from jax.experimental import pallas as pl
from jax.experimental.pallas import tpu as pltpu

EPS = 1e-5
NEG_SLOPE = 0.1


def double_conv_batch_kernel(x_ref, w1_ref, w2_ref, sm1_ref, sp1_ref,
                             g1_ref, b1_ref, g2_ref, b2_ref,
                             r1_ref, e1_ref, r2_ref, e2_ref, o_ref):
    nh = x_ref.shape[0]                      # N*H rows
    cmid = g1_ref.shape[1]
    w_dim = w1_ref.shape[1] // cmid          # spatial width W
    inv_n = 1.0 / float(nh * w_dim)          # 1 / (N*H*W) samples per channel

    def bn_lrelu(h, gamma_ref, beta_ref, reduce_ref, expand_ref):
        # one-pass batch stats (sum / sum-of-squares), folded into per-channel scale/shift
        s_l = jnp.sum(h, axis=0, keepdims=True)                  # (1, W*C) per-(w,c) sums
        q_l = jnp.sum(h * h, axis=0, keepdims=True)
        s_c = jnp.dot(s_l, reduce_ref[...], preferred_element_type=jnp.float32)  # (1, C)
        q_c = jnp.dot(q_l, reduce_ref[...], preferred_element_type=jnp.float32)
        mean = s_c * inv_n
        var = jnp.maximum(q_c * inv_n - mean * mean, 0.0)        # biased variance
        scale_c = gamma_ref[...] * lax.rsqrt(var + EPS)
        shift_c = beta_ref[...] - mean * scale_c
        scale = jnp.dot(scale_c, expand_ref[...], preferred_element_type=jnp.float32)
        shift = jnp.dot(shift_c, expand_ref[...], preferred_element_type=jnp.float32)
        h = h * scale + shift
        return jnp.maximum(h, NEG_SLOPE * h)                     # LeakyReLU(0.1)

    # ---- conv1: 1x1 conv == one MXU matmul against the block-diagonal packed weight ----
    h1 = jnp.dot(x_ref[...], w1_ref[...], preferred_element_type=jnp.float32)  # (N*H, W*Cmid)
    h1 = bn_lrelu(h1, g1_ref, b1_ref, r1_ref, e1_ref).astype(jnp.bfloat16)

    # ---- conv2: 3x3 conv, stride 1, pad 1 ----
    # ky halo rows via exact 0/1 shift matmuls (zero-filled at image borders, no unaligned
    # sublane slices); kx taps + W zero-padding live in the banded packed weight w2_ref.
    h_up = jnp.dot(sm1_ref[...], h1, preferred_element_type=jnp.float32).astype(jnp.bfloat16)
    h_dn = jnp.dot(sp1_ref[...], h1, preferred_element_type=jnp.float32).astype(jnp.bfloat16)
    patch = jnp.concatenate([h_up, h1, h_dn], axis=1)            # (N*H, 3*W*Cmid) im2col
    h2 = jnp.dot(patch, w2_ref[...], preferred_element_type=jnp.float32)  # single K=3*W*Cmid dot

    o_ref[...] = bn_lrelu(h2, g2_ref, b2_ref, r2_ref, e2_ref).astype(o_ref.dtype)


def _pack_conv2_weight(w2, W):
    """(Cout, Cmid, 3, 3) -> banded packed (3*W*Cmid, W*Cout); kx taps + W zero-pad folded in."""
    cout, cmid = w2.shape[0], w2.shape[1]
    w2t = jnp.transpose(w2, (2, 3, 1, 0)).astype(jnp.float32)    # (ky, kx, ci, co)
    wi = jnp.arange(W)[:, None]                                  # input column
    wo = jnp.arange(W)[None, :]                                  # output column
    kx = wi - wo + 1                                             # tap index mapping wi -> wo
    valid = (kx >= 0) & (kx <= 2)
    kx_c = jnp.clip(kx, 0, 2)
    blocks = []
    for ky in range(3):
        band = w2t[ky][kx_c]                                     # (W, W, Cmid, Cout)
        band = jnp.where(valid[:, :, None, None], band, 0.0)
        blocks.append(jnp.transpose(band, (0, 2, 1, 3)).reshape(W * cmid, W * cout))
    return jnp.concatenate(blocks, axis=0)                       # (3*W*Cmid, W*Cout)


@jax.jit
def double_conv_batch(x_nchw, w1, g1, b1, w2, g2, b2):
    """x_nchw: (N, Cin, H, W); w1: (Cmid, Cin, 1, 1); w2: (Cout, Cmid, 3, 3)."""
    N, Cin, H, W = x_nchw.shape
    Cmid, Cout = w1.shape[0], w2.shape[0]

    # ---- glue: layout & weight packing only ----
    x_pk = jnp.transpose(x_nchw, (0, 2, 3, 1)).reshape(N * H, W * Cin).astype(jnp.bfloat16)
    w1_mat = jnp.transpose(w1[:, :, 0, 0], (1, 0)).astype(jnp.float32)        # (Cin, Cmid)
    w1_bd = jnp.kron(jnp.eye(W, dtype=jnp.float32), w1_mat).astype(jnp.bfloat16)   # (W*Cin, W*Cmid)
    w2_pk = _pack_conv2_weight(w2, W).astype(jnp.bfloat16)                    # (3*W*Cmid, W*Cout)
    # exact 0/1 row-shift matrices for the ky = 0 / 2 halo (zero rows at image borders)
    sm1 = jnp.kron(jnp.eye(N, dtype=jnp.float32),
                   jnp.eye(H, k=-1, dtype=jnp.float32)).astype(jnp.bfloat16)  # row h -> h-1
    sp1 = jnp.kron(jnp.eye(N, dtype=jnp.float32),
                   jnp.eye(H, k=1, dtype=jnp.float32)).astype(jnp.bfloat16)   # row h -> h+1
    # channel-group reduce / broadcast matrices for BatchNorm in the packed layout
    r1 = jnp.kron(jnp.ones((W, 1), jnp.float32), jnp.eye(Cmid, dtype=jnp.float32))  # (W*Cmid, Cmid)
    r2 = jnp.kron(jnp.ones((W, 1), jnp.float32), jnp.eye(Cout, dtype=jnp.float32))  # (W*Cout, Cout)
    e1, e2 = r1.T, r2.T
    g1_k = g1.reshape(1, Cmid).astype(jnp.float32)
    b1_k = b1.reshape(1, Cmid).astype(jnp.float32)
    g2_k = g2.reshape(1, Cout).astype(jnp.float32)
    b2_k = b2.reshape(1, Cout).astype(jnp.float32)

    operands = (x_pk, w1_bd, w2_pk, sm1, sp1, g1_k, b1_k, g2_k, b2_k, r1, e1, r2, e2)

    # explicit VMEM budget sized from the actual buffers (+ headroom for intermediates)
    buf_bytes = sum(int(op.size) * op.dtype.itemsize for op in operands)
    buf_bytes += N * H * W * Cout * 4                       # output
    buf_bytes += 6 * N * H * W * max(Cmid, Cout) * 4        # live f32/bf16 intermediates
    vmem_limit = int(min(100 * 1024 * 1024, max(4 * 1024 * 1024, 4 * buf_bytes)))

    out2d = pl.pallas_call(
        double_conv_batch_kernel,
        out_shape=jax.ShapeDtypeStruct((N * H, W * Cout), jnp.float32),   # lane-dense output
        in_specs=[pl.BlockSpec(memory_space=pltpu.MemorySpace.VMEM)] * len(operands),
        out_specs=pl.BlockSpec(memory_space=pltpu.MemorySpace.VMEM),
        compiler_params=pltpu.CompilerParams(vmem_limit_bytes=vmem_limit),
    )(*operands)

    return jnp.transpose(out2d.reshape(N, H, W, Cout), (0, 3, 1, 2))      # back to NCHW


def reference(x_nchw, w1, g1, b1, w2, g2, b2, matmul_dtype=jnp.float32):
    """Pure-JAX reference of the PyTorch training-mode forward.
    matmul_dtype=bfloat16 emulates the kernel's bf16 matmul inputs (f32 accumulation)."""
    def cast(a):
        return a.astype(matmul_dtype).astype(jnp.float32)

    def bn_lrelu(h, g, b):
        m = jnp.mean(h, axis=(0, 1, 2), keepdims=True)
        v = jnp.mean(jnp.square(h - m), axis=(0, 1, 2), keepdims=True)
        h = (h - m) * lax.rsqrt(v + EPS) * g.reshape(1, 1, 1, -1) + b.reshape(1, 1, 1, -1)
        return jnp.where(h > 0, h, NEG_SLOPE * h)

    x = jnp.transpose(x_nchw, (0, 2, 3, 1)).astype(jnp.float32)
    h = jnp.einsum("nhwi,oi->nhwo", cast(x), cast(w1[:, :, 0, 0].astype(jnp.float32)))
    h = bn_lrelu(h, g1, b1)
    h = lax.conv_general_dilated(cast(h),
                                 cast(jnp.transpose(w2, (2, 3, 1, 0)).astype(jnp.float32)),
                                 window_strides=(1, 1), padding="SAME",
                                 dimension_numbers=("NHWC", "HWIO", "NHWC"))
    h = bn_lrelu(h, g2, b2)
    return jnp.transpose(h, (0, 3, 1, 2))


if __name__ == "__main__":
    N, Cin, Cmid, Cout, H, W = 2, 4, 8, 8, 16, 16
    key = jax.random.PRNGKey(0)
    kx_, k1, k2, kg1, kb1, kg2, kb2 = jax.random.split(key, 7)

    x = jax.random.normal(kx_, (N, Cin, H, W), jnp.float32)
    w1 = jax.random.normal(k1, (Cmid, Cin, 1, 1), jnp.float32) * 0.5
    w2 = jax.random.normal(k2, (Cout, Cmid, 3, 3), jnp.float32) * 0.2
    g1 = 1.0 + 0.1 * jax.random.normal(kg1, (Cmid,), jnp.float32)
    b1 = 0.1 * jax.random.normal(kb1, (Cmid,), jnp.float32)
    g2 = 1.0 + 0.1 * jax.random.normal(kg2, (Cout,), jnp.float32)
    b2 = 0.1 * jax.random.normal(kb2, (Cout,), jnp.float32)

    out = jax.block_until_ready(double_conv_batch(x, w1, g1, b1, w2, g2, b2))
    assert out.shape == (N, Cout, H, W), out.shape

    # tight check vs a reference that emulates the kernel's bf16 matmul-input rounding
    ref_bf16 = reference(x, w1, g1, b1, w2, g2, b2, matmul_dtype=jnp.bfloat16)
    err_bf16 = float(jnp.max(jnp.abs(out - ref_bf16)))
    assert jnp.allclose(out, ref_bf16, atol=1e-2, rtol=1e-2), f"bf16-ref max_err={err_bf16}"

    # sanity check vs the exact-f32 PyTorch-semantics reference (difference = bf16 rounding only)
    ref_f32 = reference(x, w1, g1, b1, w2, g2, b2, matmul_dtype=jnp.float32)
    err_f32 = float(jnp.max(jnp.abs(out - ref_f32)))
    assert jnp.allclose(out, ref_f32, atol=1e-1, rtol=1e-1), f"f32-ref max_err={err_f32}"

    print("KERNEL_OK")
</pallas_src>

<mosaic_0001>
module attributes {stable_mosaic.version = 11 : i64} {
  func.func @double_conv_batch_kernel(%arg0: memref<32x64xbf16, #tpu.memory_space<vmem>>, %arg1: memref<64x128xbf16, #tpu.memory_space<vmem>>, %arg2: memref<384x128xbf16, #tpu.memory_space<vmem>>, %arg3: memref<32x32xbf16, #tpu.memory_space<vmem>>, %arg4: memref<32x32xbf16, #tpu.memory_space<vmem>>, %arg5: memref<1x8xf32, #tpu.memory_space<vmem>>, %arg6: memref<1x8xf32, #tpu.memory_space<vmem>>, %arg7: memref<1x8xf32, #tpu.memory_space<vmem>>, %arg8: memref<1x8xf32, #tpu.memory_space<vmem>>, %arg9: memref<128x8xf32, #tpu.memory_space<vmem>>, %arg10: memref<8x128xf32, #tpu.memory_space<vmem>>, %arg11: memref<128x8xf32, #tpu.memory_space<vmem>>, %arg12: memref<8x128xf32, #tpu.memory_space<vmem>>, %arg13: memref<32x128xf32, #tpu.memory_space<vmem>>) attributes {dimension_semantics = [], scalar_prefetch = 0 : i64, scratch_operands = 0 : i64, tpu.core_type = #tpu.core_type<tc>} {
    %c0 = arith.constant 0 : index
    %c0_0 = arith.constant 0 : index
    %0 = vector.load %arg0[%c0, %c0_0] : memref<32x64xbf16, #tpu.memory_space<vmem>>, vector<32x64xbf16>
    %c0_1 = arith.constant 0 : index
    %c0_2 = arith.constant 0 : index
    %1 = vector.load %arg1[%c0_1, %c0_2] : memref<64x128xbf16, #tpu.memory_space<vmem>>, vector<64x128xbf16>
    %cst = arith.constant dense<0.000000e+00> : vector<32x128xf32>
    %2 = tpu.matmul %0, %1, %cst {dimension_numbers = #tpu.dot_dimension_numbers<[1], [0], [0], [1], [0, 0, 1, 1], [], []>} : vector<32x64xbf16>, vector<64x128xbf16>, vector<32x128xf32> -> vector<32x128xf32>
    %cst_3 = arith.constant dense<0.000000e+00> : vector<128xf32>
    %3 = vector.multi_reduction <add>, %2, %cst_3 [0] : vector<32x128xf32> to vector<128xf32>
    %4 = vector.shape_cast %3 : vector<128xf32> to vector<1x128xf32>
    %5 = arith.mulf %2, %2 : vector<32x128xf32>
    %cst_4 = arith.constant dense<0.000000e+00> : vector<128xf32>
    %6 = vector.multi_reduction <add>, %5, %cst_4 [0] : vector<32x128xf32> to vector<128xf32>
    %7 = vector.shape_cast %6 : vector<128xf32> to vector<1x128xf32>
    %c0_5 = arith.constant 0 : index
    %c0_6 = arith.constant 0 : index
    %8 = vector.load %arg9[%c0_5, %c0_6] : memref<128x8xf32, #tpu.memory_space<vmem>>, vector<128x8xf32>
    %cst_7 = arith.constant dense<0.000000e+00> : vector<1x8xf32>
    %9 = tpu.matmul %4, %8, %cst_7 {dimension_numbers = #tpu.dot_dimension_numbers<[1], [0], [0], [1], [0, 0, 1, 1], [], []>} : vector<1x128xf32>, vector<128x8xf32>, vector<1x8xf32> -> vector<1x8xf32>
    %c0_8 = arith.constant 0 : index
    %c0_9 = arith.constant 0 : index
    %10 = vector.load %arg9[%c0_8, %c0_9] : memref<128x8xf32, #tpu.memory_space<vmem>>, vector<128x8xf32>
    %cst_10 = arith.constant dense<0.000000e+00> : vector<1x8xf32>
    %11 = tpu.matmul %7, %10, %cst_10 {dimension_numbers = #tpu.dot_dimension_numbers<[1], [0], [0], [1], [0, 0, 1, 1], [], []>} : vector<1x128xf32>, vector<128x8xf32>, vector<1x8xf32> -> vector<1x8xf32>
    %cst_11 = arith.constant 0.001953125 : f32
    %12 = vector.broadcast %cst_11 : f32 to vector<1x8xf32>
    %13 = arith.mulf %9, %12 : vector<1x8xf32>
    %cst_12 = arith.constant 0.001953125 : f32
    %14 = vector.broadcast %cst_12 : f32 to vector<1x8xf32>
    %15 = arith.mulf %11, %14 : vector<1x8xf32>
    %16 = arith.mulf %13, %13 : vector<1x8xf32>
    %17 = arith.subf %15, %16 : vector<1x8xf32>
    %cst_13 = arith.constant 0.000000e+00 : f32
    %18 = vector.broadcast %cst_13 : f32 to vector<1x8xf32>
    %19 = arith.maximumf %17, %18 : vector<1x8xf32>
    %c0_14 = arith.constant 0 : index
    %c0_15 = arith.constant 0 : index
    %20 = vector.load %arg5[%c0_14, %c0_15] : memref<1x8xf32, #tpu.memory_space<vmem>>, vector<1x8xf32>
    %cst_16 = arith.constant 9.99999974E-6 : f32
    %21 = vector.broadcast %cst_16 : f32 to vector<1x8xf32>
    %22 = arith.addf %19, %21 : vector<1x8xf32>
    %23 = math.rsqrt %22 : vector<1x8xf32>
    %24 = arith.mulf %20, %23 : vector<1x8xf32>
    %c0_17 = arith.constant 0 : index
    %c0_18 = arith.constant 0 : index
    %25 = vector.load %arg6[%c0_17, %c0_18] : memref<1x8xf32, #tpu.memory_space<vmem>>, vector<1x8xf32>
    %26 = arith.mulf %13, %24 : vector<1x8xf32>
    %27 = arith.subf %25, %26 : vector<1x8xf32>
    %c0_19 = arith.constant 0 : index
    %c0_20 = arith.constant 0 : index
    %28 = vector.load %arg10[%c0_19, %c0_20] : memref<8x128xf32, #tpu.memory_space<vmem>>, vector<8x128xf32>
    %cst_21 = arith.constant dense<0.000000e+00> : vector<1x128xf32>
    %29 = tpu.matmul %24, %28, %cst_21 {dimension_numbers = #tpu.dot_dimension_numbers<[1], [0], [0], [1], [0, 0, 1, 1], [], []>} : vector<1x8xf32>, vector<8x128xf32>, vector<1x128xf32> -> vector<1x128xf32>
    %c0_22 = arith.constant 0 : index
    %c0_23 = arith.constant 0 : index
    %30 = vector.load %arg10[%c0_22, %c0_23] : memref<8x128xf32, #tpu.memory_space<vmem>>, vector<8x128xf32>
    %cst_24 = arith.constant dense<0.000000e+00> : vector<1x128xf32>
    %31 = tpu.matmul %27, %30, %cst_24 {dimension_numbers = #tpu.dot_dimension_numbers<[1], [0], [0], [1], [0, 0, 1, 1], [], []>} : vector<1x8xf32>, vector<8x128xf32>, vector<1x128xf32> -> vector<1x128xf32>
    %32 = vector.broadcast %29 : vector<1x128xf32> to vector<32x128xf32>
    %33 = arith.mulf %2, %32 : vector<32x128xf32>
    %34 = vector.broadcast %31 : vector<1x128xf32> to vector<32x128xf32>
    %35 = arith.addf %33, %34 : vector<32x128xf32>
    %cst_25 = arith.constant 1.000000e-01 : f32
    %36 = vector.broadcast %cst_25 : f32 to vector<32x128xf32>
    %37 = arith.mulf %36, %35 : vector<32x128xf32>
    %38 = arith.maximumf %35, %37 : vector<32x128xf32>
    %39 = arith.truncf %38 : vector<32x128xf32> to vector<32x128xbf16>
    %c0_26 = arith.constant 0 : index
    %c0_27 = arith.constant 0 : index
    %40 = vector.load %arg3[%c0_26, %c0_27] : memref<32x32xbf16, #tpu.memory_space<vmem>>, vector<32x32xbf16>
    %cst_28 = arith.constant dense<0.000000e+00> : vector<32x128xf32>
    %41 = tpu.matmul %40, %39, %cst_28 {dimension_numbers = #tpu.dot_dimension_numbers<[1], [0], [0], [1], [0, 0, 1, 1], [], []>} : vector<32x32xbf16>, vector<32x128xbf16>, vector<32x128xf32> -> vector<32x128xf32>
    %42 = arith.truncf %41 : vector<32x128xf32> to vector<32x128xbf16>
    %c0_29 = arith.constant 0 : index
    %c0_30 = arith.constant 0 : index
    %43 = vector.load %arg4[%c0_29, %c0_30] : memref<32x32xbf16, #tpu.memory_space<vmem>>, vector<32x32xbf16>
    %cst_31 = arith.constant dense<0.000000e+00> : vector<32x128xf32>
    %44 = tpu.matmul %43, %39, %cst_31 {dimension_numbers = #tpu.dot_dimension_numbers<[1], [0], [0], [1], [0, 0, 1, 1], [], []>} : vector<32x32xbf16>, vector<32x128xbf16>, vector<32x128xf32> -> vector<32x128xf32>
    %45 = arith.truncf %44 : vector<32x128xf32> to vector<32x128xbf16>
    %46 = tpu.concatenate %42, %39, %45 in 1 : vector<32x128xbf16>, vector<32x128xbf16>, vector<32x128xbf16> -> vector<32x384xbf16>
    %c0_32 = arith.constant 0 : index
    %c0_33 = arith.constant 0 : index
    %47 = vector.load %arg2[%c0_32, %c0_33] : memref<384x128xbf16, #tpu.memory_space<vmem>>, vector<384x128xbf16>
    %cst_34 = arith.constant dense<0.000000e+00> : vector<32x128xf32>
    %48 = tpu.matmul %46, %47, %cst_34 {dimension_numbers = #tpu.dot_dimension_numbers<[1], [0], [0], [1], [0, 0, 1, 1], [], []>} : vector<32x384xbf16>, vector<384x128xbf16>, vector<32x128xf32> -> vector<32x128xf32>
    %cst_35 = arith.constant dense<0.000000e+00> : vector<128xf32>
    %49 = vector.multi_reduction <add>, %48, %cst_35 [0] : vector<32x128xf32> to vector<128xf32>
    %50 = vector.shape_cast %49 : vector<128xf32> to vector<1x128xf32>
    %51 = arith.mulf %48, %48 : vector<32x128xf32>
    %cst_36 = arith.constant dense<0.000000e+00> : vector<128xf32>
    %52 = vector.multi_reduction <add>, %51, %cst_36 [0] : vector<32x128xf32> to vector<128xf32>
    %53 = vector.shape_cast %52 : vector<128xf32> to vector<1x128xf32>
    %c0_37 = arith.constant 0 : index
    %c0_38 = arith.constant 0 : index
    %54 = vector.load %arg11[%c0_37, %c0_38] : memref<128x8xf32, #tpu.memory_space<vmem>>, vector<128x8xf32>
    %cst_39 = arith.constant dense<0.000000e+00> : vector<1x8xf32>
    %55 = tpu.matmul %50, %54, %cst_39 {dimension_numbers = #tpu.dot_dimension_numbers<[1], [0], [0], [1], [0, 0, 1, 1], [], []>} : vector<1x128xf32>, vector<128x8xf32>, vector<1x8xf32> -> vector<1x8xf32>
    %c0_40 = arith.constant 0 : index
    %c0_41 = arith.constant 0 : index
    %56 = vector.load %arg11[%c0_40, %c0_41] : memref<128x8xf32, #tpu.memory_space<vmem>>, vector<128x8xf32>
    %cst_42 = arith.constant dense<0.000000e+00> : vector<1x8xf32>
    %57 = tpu.matmul %53, %56, %cst_42 {dimension_numbers = #tpu.dot_dimension_numbers<[1], [0], [0], [1], [0, 0, 1, 1], [], []>} : vector<1x128xf32>, vector<128x8xf32>, vector<1x8xf32> -> vector<1x8xf32>
    %cst_43 = arith.constant 0.001953125 : f32
    %58 = vector.broadcast %cst_43 : f32 to vector<1x8xf32>
    %59 = arith.mulf %55, %58 : vector<1x8xf32>
    %cst_44 = arith.constant 0.001953125 : f32
    %60 = vector.broadcast %cst_44 : f32 to vector<1x8xf32>
    %61 = arith.mulf %57, %60 : vector<1x8xf32>
    %62 = arith.mulf %59, %59 : vector<1x8xf32>
    %63 = arith.subf %61, %62 : vector<1x8xf32>
    %cst_45 = arith.constant 0.000000e+00 : f32
    %64 = vector.broadcast %cst_45 : f32 to vector<1x8xf32>
    %65 = arith.maximumf %63, %64 : vector<1x8xf32>
    %c0_46 = arith.constant 0 : index
    %c0_47 = arith.constant 0 : index
    %66 = vector.load %arg7[%c0_46, %c0_47] : memref<1x8xf32, #tpu.memory_space<vmem>>, vector<1x8xf32>
    %cst_48 = arith.constant 9.99999974E-6 : f32
    %67 = vector.broadcast %cst_48 : f32 to vector<1x8xf32>
    %68 = arith.addf %65, %67 : vector<1x8xf32>
    %69 = math.rsqrt %68 : vector<1x8xf32>
    %70 = arith.mulf %66, %69 : vector<1x8xf32>
    %c0_49 = arith.constant 0 : index
    %c0_50 = arith.constant 0 : index
    %71 = vector.load %arg8[%c0_49, %c0_50] : memref<1x8xf32, #tpu.memory_space<vmem>>, vector<1x8xf32>
    %72 = arith.mulf %59, %70 : vector<1x8xf32>
    %73 = arith.subf %71, %72 : vector<1x8xf32>
    %c0_51 = arith.constant 0 : index
    %c0_52 = arith.constant 0 : index
    %74 = vector.load %arg12[%c0_51, %c0_52] : memref<8x128xf32, #tpu.memory_space<vmem>>, vector<8x128xf32>
    %cst_53 = arith.constant dense<0.000000e+00> : vector<1x128xf32>
    %75 = tpu.matmul %70, %74, %cst_53 {dimension_numbers = #tpu.dot_dimension_numbers<[1], [0], [0], [1], [0, 0, 1, 1], [], []>} : vector<1x8xf32>, vector<8x128xf32>, vector<1x128xf32> -> vector<1x128xf32>
    %c0_54 = arith.constant 0 : index
    %c0_55 = arith.constant 0 : index
    %76 = vector.load %arg12[%c0_54, %c0_55] : memref<8x128xf32, #tpu.memory_space<vmem>>, vector<8x128xf32>
    %cst_56 = arith.constant dense<0.000000e+00> : vector<1x128xf32>
    %77 = tpu.matmul %73, %76, %cst_56 {dimension_numbers = #tpu.dot_dimension_numbers<[1], [0], [0], [1], [0, 0, 1, 1], [], []>} : vector<1x8xf32>, vector<8x128xf32>, vector<1x128xf32> -> vector<1x128xf32>
    %78 = vector.broadcast %75 : vector<1x128xf32> to vector<32x128xf32>
    %79 = arith.mulf %48, %78 : vector<32x128xf32>
    %80 = vector.broadcast %77 : vector<1x128xf32> to vector<32x128xf32>
    %81 = arith.addf %79, %80 : vector<32x128xf32>
    %cst_57 = arith.constant 1.000000e-01 : f32
    %82 = vector.broadcast %cst_57 : f32 to vector<32x128xf32>
    %83 = arith.mulf %82, %81 : vector<32x128xf32>
    %84 = arith.maximumf %81, %83 : vector<32x128xf32>
    %c0_58 = arith.constant 0 : index
    %c0_59 = arith.constant 0 : index
    %85 = vector.load %arg13[%c0_58, %c0_59] : memref<32x128xf32, #tpu.memory_space<vmem>>, vector<32x128xf32>
    tpu.vector_store %arg13[%c0_58, %c0_59], %84 {strides = array<i32>} : memref<32x128xf32, #tpu.memory_space<vmem>>, vector<32x128xf32>,
    return
  }
}

</mosaic_0001>

<llo_original>
// kernel: double_conv_batch.1
$region0: #{double_conv_batch.1}
  #allocation0 [shape = 'u32[]', space=smem, size = 0x4, offset = 0x4, fixed_abs, tag = 'smem constant byte address 0x4 - core index']
  #allocation1 [shape = 'u32[144,128]{1,0:T(1,128)}', space=vmem, size = 0x12000, scoped, tag = 'internal scratch']
  %s0 = inlined_call_operand.vmem [shape: bf16[32,64], index: 0, kind: input, shape index: {}]
  %s1 = inlined_call_operand.vmem [shape: bf16[64,128], index: 1, kind: input, shape index: {}]
  %s2 = inlined_call_operand.vmem [shape: bf16[384,128], index: 2, kind: input, shape index: {}]
  %s3 = inlined_call_operand.vmem [shape: bf16[32,32], index: 3, kind: input, shape index: {}]
  %s4 = inlined_call_operand.vmem [shape: bf16[32,32], index: 4, kind: input, shape index: {}]
  %s5 = inlined_call_operand.vmem [shape: f32[1,8], index: 5, kind: input, shape index: {}]
  %s6 = inlined_call_operand.vmem [shape: f32[1,8], index: 6, kind: input, shape index: {}]
  %s7 = inlined_call_operand.vmem [shape: f32[1,8], index: 7, kind: input, shape index: {}]
  %s8 = inlined_call_operand.vmem [shape: f32[1,8], index: 8, kind: input, shape index: {}]
  %s9 = inlined_call_operand.vmem [shape: f32[128,8], index: 9, kind: input, shape index: {}, may-alias: {9,11}]
  %s10 = inlined_call_operand.vmem [shape: f32[8,128], index: 10, kind: input, shape index: {}, may-alias: {10,12}]
  %s11 = inlined_call_operand.vmem [shape: f32[128,8], index: 11, kind: input, shape index: {}, may-alias: {9,11}]
  %s12 = inlined_call_operand.vmem [shape: f32[8,128], index: 12, kind: input, shape index: {}, may-alias: {10,12}]
  %s13 = inlined_call_operand.vmem [shape: f32[32,128], index: 13, kind: output, shape index: {}]
  %s14 = sld [smem:[#allocation0]]
  $region62: #{double_conv_batch.1} parent=0
    _
  %s16 = ssub.s32 1, %s14
  %s17 = scalar_select 0, %s16, %s14
  // Predicated region
  $region2: #{double_conv_batch.1} parent=0 // pred_check
    _
  $region3: #{double_conv_batch.1} parent=0 // pred_check_branch
    %19 = sbr.rel (0) target = $region5
  $region4: #{double_conv_batch.1} parent=0 // pred_region
    _
  $region5: #{double_conv_batch.1} parent=0 // pred_fallthru
    _
  // Predicated region
  $region6: #{double_conv_batch.1} parent=0 // pred_check
    _
  $region7: #{double_conv_batch.1} parent=0 // pred_check_branch
    %21 = sbr.rel (0) target = $region9
  $region8: #{double_conv_batch.1} parent=0 // pred_region
    _
  $region9: #{double_conv_batch.1} parent=0 // pred_fallthru
    _
  // Predicated region
  $region10: #{double_conv_batch.1} parent=0 // pred_check
    _
  $region11: #{double_conv_batch.1} parent=0 // pred_check_branch
    %23 = sbr.rel (0) target = $region13
  $region12: #{double_conv_batch.1} parent=0 // pred_region
    _
  $region13: #{double_conv_batch.1} parent=0 // pred_fallthru
    _
  // Predicated region
  $region14: #{double_conv_batch.1} parent=0 // pred_check
    _
  $region15: #{double_conv_batch.1} parent=0 // pred_check_branch
    %25 = sbr.rel (0) target = $region17
  $region16: #{double_conv_batch.1} parent=0 // pred_region
    _
  $region17: #{double_conv_batch.1} parent=0 // pred_fallthru
    _
  // Predicated region
  $region18: #{double_conv_batch.1} parent=0 // pred_check
    _
  $region19: #{double_conv_batch.1} parent=0 // pred_check_branch
    %27 = sbr.rel (0) target = $region21
  $region20: #{double_conv_batch.1} parent=0 // pred_region
    _
  $region21: #{double_conv_batch.1} parent=0 // pred_fallthru
    _
  // Predicated region
  $region22: #{double_conv_batch.1} parent=0 // pred_check
    _
  $region23: #{double_conv_batch.1} parent=0 // pred_check_branch
    %29 = sbr.rel (0) target = $region25
  $region24: #{double_conv_batch.1} parent=0 // pred_region
    _
  $region25: #{double_conv_batch.1} parent=0 // pred_fallthru
    _
  // Predicated region
  $region26: #{double_conv_batch.1} parent=0 // pred_check
    _
  $region27: #{double_conv_batch.1} parent=0 // pred_check_branch
    %31 = sbr.rel (0) target = $region29
  $region28: #{double_conv_batch.1} parent=0 // pred_region
    _
  $region29: #{double_conv_batch.1} parent=0 // pred_fallthru
    _
  // Predicated region
  $region30: #{double_conv_batch.1} parent=0 // pred_check
    _
  $region31: #{double_conv_batch.1} parent=0 // pred_check_branch
    %33 = sbr.rel (0) target = $region33
  $region32: #{double_conv_batch.1} parent=0 // pred_region
    _
  $region33: #{double_conv_batch.1} parent=0 // pred_fallthru
    _
  // Predicated region
  $region34: #{double_conv_batch.1} parent=0 // pred_check
    _
  $region35: #{double_conv_batch.1} parent=0 // pred_check_branch
    %35 = sbr.rel (0) target = $region37
  $region36: #{double_conv_batch.1} parent=0 // pred_region
    _
  $region37: #{double_conv_batch.1} parent=0 // pred_fallthru
    _
  // Predicated region
  $region38: #{double_conv_batch.1} parent=0 // pred_check
    _
  $region39: #{double_conv_batch.1} parent=0 // pred_check_branch
    %37 = sbr.rel (0) target = $region41
  $region40: #{double_conv_batch.1} parent=0 // pred_region
    _
  $region41: #{double_conv_batch.1} parent=0 // pred_fallthru
    _
  // Predicated region
  $region42: #{double_conv_batch.1} parent=0 // pred_check
    _
  $region43: #{double_conv_batch.1} parent=0 // pred_check_branch
    %39 = sbr.rel (0) target = $region45
  $region44: #{double_conv_batch.1} parent=0 // pred_region
    _
  $region45: #{double_conv_batch.1} parent=0 // pred_fallthru
    _
  // Predicated region
  $region46: #{double_conv_batch.1} parent=0 // pred_check
    _
  $region47: #{double_conv_batch.1} parent=0 // pred_check_branch
    %41 = sbr.rel (0) target = $region49
  $region48: #{double_conv_batch.1} parent=0 // pred_region
    _
  $region49: #{double_conv_batch.1} parent=0 // pred_fallthru
    _
  // Predicated region
  $region50: #{double_conv_batch.1} parent=0 // pred_check
    _
  $region51: #{double_conv_batch.1} parent=0 // pred_check_branch
    %43 = sbr.rel (0) target = $region53
  $region52: #{double_conv_batch.1} parent=0 // pred_region
    _
  $region53: #{double_conv_batch.1} parent=0 // pred_fallthru
    _
  %v45 = vld [vmem:[%s0] sm:$0xf]
  %v46 = vld [vmem:[%s0 + $0x4] sm:$0xf]
  %v47 = vld [vmem:[%s0 + $0x8] sm:$0xf]
  %v48 = vld [vmem:[%s0 + $0xc] sm:$0xf]
  %v49 = vld [vmem:[%s1] sm:$0xf]
  %v50 = vld [vmem:[%s1 + $0x4] sm:$0xf]
  %v51 = vld [vmem:[%s1 + $0x8] sm:$0xf]
  %v52 = vld [vmem:[%s1 + $0xc] sm:$0xf]
  %v53 = vld [vmem:[%s1 + $0x10] sm:$0xf]
  %v54 = vld [vmem:[%s1 + $0x14] sm:$0xf]
  %v55 = vld [vmem:[%s1 + $0x18] sm:$0xf]
  %v56 = vld [vmem:[%s1 + $0x1c] sm:$0xf]
  %v61 = vunpack.c.l.b16 %v45
  %v62 = vunpack.c.l.b16 %v46
  %v63 = vunpack.c.l.b16 %v47
  %v64 = vunpack.c.l.b16 %v48
  %v65 = vpack.c.b16 %v62, %v61
  %v66 = vpack.c.b16 %v64, %v63
  %v75 = vunpack.c.l.b16 %v49
  %v76 = vunpack.c.l.b16 %v50
  %v77 = vunpack.c.l.b16 %v51
  %v78 = vunpack.c.l.b16 %v52
  %v79 = vunpack.c.l.b16 %v53
  %v80 = vunpack.c.l.b16 %v54
  %v81 = vunpack.c.l.b16 %v55
  %v82 = vunpack.c.l.b16 %v56
  %v83 = vpack.c.b16 %v76, %v75
  %v84 = vpack.c.b16 %v78, %v77
  %v85 = vpack.c.b16 %v80, %v79
  %v86 = vpack.c.b16 %v82, %v81
  %vm91 = vcmask 523264
  %v93 = vsel %vm91, %v65, 0
  %v96 = vsel %vm91, %v66, 0
  %98 = vmatprep.subr.bf16.mxu0 0
  %99 = vmatpush1.bf16.msra.mxu0 0
  %100 = vmatprep.subr.bf16.mxu0 0
  %101 = vmatpush1.bf16.msra.mxu0 0
  %102 = vmatprep.subr.bf16.mxu0 0
  %103 = vmatpush1.bf16.msra.mxu0 0
  %104 = vmatprep.subr.bf16.mxu0 0
  %105 = vmatpush1.bf16.msra.mxu0 0
  %106 = vmatprep.subr.bf16.mxu0 0
  %107 = vmatpush1.bf16.msra.mxu0 %v86
  %108 = vmatprep.subr.bf16.mxu0 0
  %109 = vmatpush1.bf16.msra.mxu0 %v85
  %110 = vmatprep.subr.bf16.mxu0 0
  %111 = vmatpush1.bf16.msra.mxu0 %v84
  %112 = vmatprep.subr.bf16.mxu0 0
  %113 = vmatpush1.bf16.msra.mxu0 %v83
  %114 = vmatprep.subr.bf16.mxu0 0
  %115 = vmatpush2.bf16.msra.mxu0 0
  %116 = vmatprep.subr.bf16.mxu0 0
  %117 = vmatpush2.bf16.msra.mxu0 0
  %118 = vmatprep.subr.bf16.mxu0 0
  %119 = vmatpush2.bf16.msra.mxu0 0
  %120 = vmatprep.subr.bf16.mxu0 0
  %121 = vmatpush2.bf16.msra.mxu0 0
  %122 = vmatprep.subr.bf16.mxu0 0
  %123 = vmatpush2.bf16.msra.mxu0 0
  %124 = vmatprep.subr.bf16.mxu0 0
  %125 = vmatpush2.bf16.msra.mxu0 0
  %126 = vmatprep.subr.bf16.mxu0 0
  %127 = vmatpush2.bf16.msra.mxu0 0
  %128 = vmatprep.subr.bf16.mxu0 0
  %129 = vmatpush2.bf16.msra.mxu0 0
  %130 = vmatprep.mubr.bf16.mxu0 0
  %131 = vmatmul.mubr.bf16.gmra.mxu0 %v93
  %v132 = vpop.f32.mrf.mxu0
  %v133 = vadd.f32 0.0, %v132
  %v134 = vpop.f32.mrf.mxu0
  %v135 = vpop.f32.mrf.mxu0
  %v136 = vadd.f32 0.0, %v135
  %v137 = vpop.f32.mrf.mxu0
  %138 = vmatprep.mubr.bf16.mxu0 0
  %139 = vmatmul.mubr.bf16.gmra.mxu0 %v96
  %v140 = vpop.f32.mrf.mxu0
  %v141 = vadd.f32 0.0, %v140
  %v142 = vpop.f32.mrf.mxu0
  %v143 = vpop.f32.mrf.mxu0
  %v144 = vadd.f32 0.0, %v143
  %v145 = vpop.f32.mrf.mxu0
  %146 = vdwg.mxu0
  %v147 = vadd.f32 %v133, %v136
  %v148 = vadd.f32 %v147, %v141
  %v149 = vadd.f32 %v148, %v144
  %v150 = vrot.slane %v149, 4
  %v151 = vadd.f32 %v149, %v150
  %v152 = vrot.slane %v151, 2
  %v153 = vadd.f32 %v151, %v152
  %v154 = vrot.slane %v153, 1
  %v155 = vadd.f32 %v153, %v154
  %v156 = vmul.f32 %v133, %v133
  %v157 = vmul.f32 %v136, %v136
  %v158 = vmul.f32 %v141, %v141
  %v159 = vmul.f32 %v144, %v144
  %v160 = vadd.f32 %v156, %v157
  %v161 = vadd.f32 %v160, %v158
  %v162 = vadd.f32 %v161, %v159
  %v163 = vrot.slane %v162, 4
  %v164 = vadd.f32 %v162, %v163
  %v165 = vrot.slane %v164, 2
  %v166 = vadd.f32 %v164, %v165
  %v167 = vrot.slane %v166, 1
  %v168 = vadd.f32 %v166, %v167
  %v169 = vld [vmem:[%s9] sm:$0xff]
  %v170 = vld [vmem:[%s9 + $0x8] sm:$0xff]
  %v171 = vld [vmem:[%s9 + $0x10] sm:$0xff]
  %v172 = vld [vmem:[%s9 + $0x18] sm:$0xff]
  %v173 = vld [vmem:[%s9 + $0x20] sm:$0xff]
  %v174 = vld [vmem:[%s9 + $0x28] sm:$0xff]
  %v175 = vld [vmem:[%s9 + $0x30] sm:$0xff]
  %v176 = vld [vmem:[%s9 + $0x38] sm:$0xff]
  %v177 = vld [vmem:[%s9 + $0x40] sm:$0xff]
  %v178 = vld [vmem:[%s9 + $0x48] sm:$0xff]
  %v179 = vld [vmem:[%s9 + $0x50] sm:$0xff]
  %v180 = vld [vmem:[%s9 + $0x58] sm:$0xff]
  %v181 = vld [vmem:[%s9 + $0x60] sm:$0xff]
  %v182 = vld [vmem:[%s9 + $0x68] sm:$0xff]
  %v183 = vld [vmem:[%s9 + $0x70] sm:$0xff]
  %v184 = vld [vmem:[%s9 + $0x78] sm:$0xff]
  %185 = vmatprep.subr.mxu0 0.0
  %186 = vmatpush1.msra.mxu0 %v184
  %187 = vmatprep.subr.mxu0 0.0
  %188 = vmatpush1.msra.mxu0 %v183
  %189 = vmatprep.subr.mxu0 0.0
  %190 = vmatpush1.msra.mxu0 %v182
  %191 = vmatprep.subr.mxu0 0.0
  %192 = vmatpush1.msra.mxu0 %v181
  %193 = vmatprep.subr.mxu0 0.0
  %194 = vmatpush1.msra.mxu0 %v180
  %195 = vmatprep.subr.mxu0 0.0
  %196 = vmatpush1.msra.mxu0 %v179
  %197 = vmatprep.subr.mxu0 0.0
  %198 = vmatpush1.msra.mxu0 %v178
  %199 = vmatprep.subr.mxu0 0.0
  %200 = vmatpush1.msra.mxu0 %v177
  %201 = vmatprep.subr.mxu0 0.0
  %202 = vmatpush1.msra.mxu0 %v176
  %203 = vmatprep.subr.mxu0 0.0
  %204 = vmatpush1.msra.mxu0 %v175
  %205 = vmatprep.subr.mxu0 0.0
  %206 = vmatpush1.msra.mxu0 %v174
  %207 = vmatprep.subr.mxu0 0.0
  %208 = vmatpush1.msra.mxu0 %v173
  %209 = vmatprep.subr.mxu0 0.0
  %210 = vmatpush1.msra.mxu0 %v172
  %211 = vmatprep.subr.mxu0 0.0
  %212 = vmatpush1.msra.mxu0 %v171
  %213 = vmatprep.subr.mxu0 0.0
  %214 = vmatpush1.msra.mxu0 %v170
  %215 = vmatprep.subr.mxu0 0.0
  %216 = vmatpush1.msra.mxu0 %v169
  %217 = vmatprep.subr.mxu0 0.0
  %218 = vmatpush2.msra.mxu0 0.0
  %219 = vmatprep.subr.mxu0 0.0
  %220 = vmatpush2.msra.mxu0 0.0
  %221 = vmatprep.subr.mxu0 0.0
  %222 = vmatpush2.msra.mxu0 0.0
  %223 = vmatprep.subr.mxu0 0.0
  %224 = vmatpush2.msra.mxu0 0.0
  %225 = vmatprep.subr.mxu0 0.0
  %226 = vmatpush2.msra.mxu0 0.0
  %227 = vmatprep.subr.mxu0 0.0
  %228 = vmatpush2.msra.mxu0 0.0
  %229 = vmatprep.subr.mxu0 0.0
  %230 = vmatpush2.msra.mxu0 0.0
  %231 = vmatprep.subr.mxu0 0.0
  %232 = vmatpush2.msra.mxu0 0.0
  %233 = vmatprep.subr.mxu0 0.0
  %234 = vmatpush2.msra.mxu0 0.0
  %235 = vmatprep.subr.mxu0 0.0
  %236 = vmatpush2.msra.mxu0 0.0
  %237 = vmatprep.subr.mxu0 0.0
  %238 = vmatpush2.msra.mxu0 0.0
  %239 = vmatprep.subr.mxu0 0.0
  %240 = vmatpush2.msra.mxu0 0.0
  %241 = vmatprep.subr.mxu0 0.0
  %242 = vmatpush2.msra.mxu0 0.0
  %243 = vmatprep.subr.mxu0 0.0
  %244 = vmatpush2.msra.mxu0 0.0
  %245 = vmatprep.subr.mxu0 0.0
  %246 = vmatpush2.msra.mxu0 0.0
  %247 = vmatprep.subr.mxu0 0.0
  %248 = vmatpush2.msra.mxu0 0.0
  %249 = vmatprep.mubr.f32.mxu0 0.0
  %250 = vmatmul.mubr.f32.gmra.mxu0 %v155
  %v251 = vpop.f32.mrf.mxu0
  %v252 = vadd.f32 0.0, %v251
  %v253 = vpop.f32.mrf.mxu0
  %254 = vdwg.mxu0
  %255 = vmatprep.subr.mxu0 0.0
  %256 = vmatpush1.msra.mxu0 %v184
  %257 = vmatprep.subr.mxu0 0.0
  %258 = vmatpush1.msra.mxu0 %v183
  %259 = vmatprep.subr.mxu0 0.0
  %260 = vmatpush1.msra.mxu0 %v182
  %261 = vmatprep.subr.mxu0 0.0
  %262 = vmatpush1.msra.mxu0 %v181
  %263 = vmatprep.subr.mxu0 0.0
  %264 = vmatpush1.msra.mxu0 %v180
  %265 = vmatprep.subr.mxu0 0.0
  %266 = vmatpush1.msra.mxu0 %v179
  %267 = vmatprep.subr.mxu0 0.0
  %268 = vmatpush1.msra.mxu0 %v178
  %269 = vmatprep.subr.mxu0 0.0
  %270 = vmatpush1.msra.mxu0 %v177
  %271 = vmatprep.subr.mxu0 0.0
  %272 = vmatpush1.msra.mxu0 %v176
  %273 = vmatprep.subr.mxu0 0.0
  %274 = vmatpush1.msra.mxu0 %v175
  %275 = vmatprep.subr.mxu0 0.0
  %276 = vmatpush1.msra.mxu0 %v174
  %277 = vmatprep.subr.mxu0 0.0
  %278 = vmatpush1.msra.mxu0 %v173
  %279 = vmatprep.subr.mxu0 0.0
  %280 = vmatpush1.msra.mxu0 %v172
  %281 = vmatprep.subr.mxu0 0.0
  %282 = vmatpush1.msra.mxu0 %v171
  %283 = vmatprep.subr.mxu0 0.0
  %284 = vmatpush1.msra.mxu0 %v170
  %285 = vmatprep.subr.mxu0 0.0
  %286 = vmatpush1.msra.mxu0 %v169
  %287 = vmatprep.subr.mxu0 0.0
  %288 = vmatpush2.msra.mxu0 0.0
  %289 = vmatprep.subr.mxu0 0.0
  %290 = vmatpush2.msra.mxu0 0.0
  %291 = vmatprep.subr.mxu0 0.0
  %292 = vmatpush2.msra.mxu0 0.0
  %293 = vmatprep.subr.mxu0 0.0
  %294 = vmatpush2.msra.mxu0 0.0
  %295 = vmatprep.subr.mxu0 0.0
  %296 = vmatpush2.msra.mxu0 0.0
  %297 = vmatprep.subr.mxu0 0.0
  %298 = vmatpush2.msra.mxu0 0.0
  %299 = vmatprep.subr.mxu0 0.0
  %300 = vmatpush2.msra.mxu0 0.0
  %301 = vmatprep.subr.mxu0 0.0
  %302 = vmatpush2.msra.mxu0 0.0
  %303 = vmatprep.subr.mxu0 0.0
  %304 = vmatpush2.msra.mxu0 0.0
  %305 = vmatprep.subr.mxu0 0.0
  %306 = vmatpush2.msra.mxu0 0.0
  %307 = vmatprep.subr.mxu0 0.0
  %308 = vmatpush2.msra.mxu0 0.0
  %309 = vmatprep.subr.mxu0 0.0
  %310 = vmatpush2.msra.mxu0 0.0
  %311 = vmatprep.subr.mxu0 0.0
  %312 = vmatpush2.msra.mxu0 0.0
  %313 = vmatprep.subr.mxu0 0.0
  %314 = vmatpush2.msra.mxu0 0.0
  %315 = vmatprep.subr.mxu0 0.0
  %316 = vmatpush2.msra.mxu0 0.0
  %317 = vmatprep.subr.mxu0 0.0
  %318 = vmatpush2.msra.mxu0 0.0
  %319 = vmatprep.mubr.f32.mxu0 0.0
  %320 = vmatmul.mubr.f32.gmra.mxu0 %v168
  %v321 = vpop.f32.mrf.mxu0
  %v322 = vadd.f32 0.0, %v321
  %v323 = vpop.f32.mrf.mxu0
  %324 = vdwg.mxu0
  %v325 = vmul.f32 %v252, 0.001953125
  %v326 = vmul.f32 %v322, 0.001953125
  %v327 = vmul.f32 %v325, %v325
  %v328 = vsub.f32 %v326, %v327
  %v329 = vmax.f32 %v328, 0.0
  %v330 = vld [vmem:[%s5] sm:$0x1]
  %v331 = vadd.f32 %v329, 1e-05
  %v332 = vrsqrt.pop %v331
  %v333 = vmul.f32 %v330, %v332
  %v334 = vld [vmem:[%s6] sm:$0x1]
  %v335 = vmul.f32 %v325, %v333
  %v336 = vsub.f32 %v334, %v335
  %v337 = vld [vmem:[%s10] sm:$0xff]
  %vm338 = vcmask 64512
  %v340 = vsel %vm338, %v333, 0
  %342 = vmatprep.subr.mxu0 0.0
  %343 = vmatpush1.msra.mxu0 0.0
  %344 = vmatprep.subr.mxu0 0.0
  %345 = vmatpush1.msra.mxu0 0.0
  %346 = vmatprep.subr.mxu0 0.0
  %347 = vmatpush1.msra.mxu0 0.0
  %348 = vmatprep.subr.mxu0 0.0
  %349 = vmatpush1.msra.mxu0 0.0
  %350 = vmatprep.subr.mxu0 0.0
  %351 = vmatpush1.msra.mxu0 0.0
  %352 = vmatprep.subr.mxu0 0.0
  %353 = vmatpush1.msra.mxu0 0.0
  %354 = vmatprep.subr.mxu0 0.0
  %355 = vmatpush1.msra.mxu0 0.0
  %356 = vmatprep.subr.mxu0 0.0
  %357 = vmatpush1.msra.mxu0 0.0
  %358 = vmatprep.subr.mxu0 0.0
  %359 = vmatpush1.msra.mxu0 0.0
  %360 = vmatprep.subr.mxu0 0.0
  %361 = vmatpush1.msra.mxu0 0.0
  %362 = vmatprep.subr.mxu0 0.0
  %363 = vmatpush1.msra.mxu0 0.0
  %364 = vmatprep.subr.mxu0 0.0
  %365 = vmatpush1.msra.mxu0 0.0
  %366 = vmatprep.subr.mxu0 0.0
  %367 = vmatpush1.msra.mxu0 0.0
  %368 = vmatprep.subr.mxu0 0.0
  %369 = vmatpush1.msra.mxu0 0.0
  %370 = vmatprep.subr.mxu0 0.0
  %371 = vmatpush1.msra.mxu0 0.0
  %372 = vmatprep.subr.mxu0 0.0
  %373 = vmatpush1.msra.mxu0 %v337
  %374 = vmatprep.subr.mxu0 0.0
  %375 = vmatpush2.msra.mxu0 0.0
  %376 = vmatprep.subr.mxu0 0.0
  %377 = vmatpush2.msra.mxu0 0.0
  %378 = vmatprep.subr.mxu0 0.0
  %379 = vmatpush2.msra.mxu0 0.0
  %380 = vmatprep.subr.mxu0 0.0
  %381 = vmatpush2.msra.mxu0 0.0
  %382 = vmatprep.subr.mxu0 0.0
  %383 = vmatpush2.msra.mxu0 0.0
  %384 = vmatprep.subr.mxu0 0.0
  %385 = vmatpush2.msra.mxu0 0.0
  %386 = vmatprep.subr.mxu0 0.0
  %387 = vmatpush2.msra.mxu0 0.0
  %388 = vmatprep.subr.mxu0 0.0
  %389 = vmatpush2.msra.mxu0 0.0
  %390 = vmatprep.subr.mxu0 0.0
  %391 = vmatpush2.msra.mxu0 0.0
  %392 = vmatprep.subr.mxu0 0.0
  %393 = vmatpush2.msra.mxu0 0.0
  %394 = vmatprep.subr.mxu0 0.0
  %395 = vmatpush2.msra.mxu0 0.0
  %396 = vmatprep.subr.mxu0 0.0
  %397 = vmatpush2.msra.mxu0 0.0
  %398 = vmatprep.subr.mxu0 0.0
  %399 = vmatpush2.msra.mxu0 0.0
  %400 = vmatprep.subr.mxu0 0.0
  %401 = vmatpush2.msra.mxu0 0.0
  %402 = vmatprep.subr.mxu0 0.0
  %403 = vmatpush2.msra.mxu0 0.0
  %404 = vmatprep.subr.mxu0 0.0
  %405 = vmatpush2.msra.mxu0 0.0
  %406 = vmatprep.mubr.f32.mxu0 0.0
  %407 = vmatmul.mubr.f32.gmra.mxu0 %v340
  %v408 = vpop.f32.mrf.mxu0
  %v409 = vadd.f32 0.0, %v408
  %v410 = vpop.f32.mrf.mxu0
  %411 = vdwg.mxu0
  %v413 = vsel %vm338, %v336, 0
  %415 = vmatprep.subr.mxu0 0.0
  %416 = vmatpush1.msra.mxu0 0.0
  %417 = vmatprep.subr.mxu0 0.0
  %418 = vmatpush1.msra.mxu0 0.0
  %419 = vmatprep.subr.mxu0 0.0
  %420 = vmatpush1.msra.mxu0 0.0
  %421 = vmatprep.subr.mxu0 0.0
  %422 = vmatpush1.msra.mxu0 0.0
  %423 = vmatprep.subr.mxu0 0.0
  %424 = vmatpush1.msra.mxu0 0.0
  %425 = vmatprep.subr.mxu0 0.0
  %426 = vmatpush1.msra.mxu0 0.0
  %427 = vmatprep.subr.mxu0 0.0
  %428 = vmatpush1.msra.mxu0 0.0
  %429 = vmatprep.subr.mxu0 0.0
  %430 = vmatpush1.msra.mxu0 0.0
  %431 = vmatprep.subr.mxu0 0.0
  %432 = vmatpush1.msra.mxu0 0.0
  %433 = vmatprep.subr.mxu0 0.0
  %434 = vmatpush1.msra.mxu0 0.0
  %435 = vmatprep.subr.mxu0 0.0
  %436 = vmatpush1.msra.mxu0 0.0
  %437 = vmatprep.subr.mxu0 0.0
  %438 = vmatpush1.msra.mxu0 0.0
  %439 = vmatprep.subr.mxu0 0.0
  %440 = vmatpush1.msra.mxu0 0.0
  %441 = vmatprep.subr.mxu0 0.0
  %442 = vmatpush1.msra.mxu0 0.0
  %443 = vmatprep.subr.mxu0 0.0
  %444 = vmatpush1.msra.mxu0 0.0
  %445 = vmatprep.subr.mxu0 0.0
  %446 = vmatpush1.msra.mxu0 %v337
  %447 = vmatprep.subr.mxu0 0.0
  %448 = vmatpush2.msra.mxu0 0.0
  %449 = vmatprep.subr.mxu0 0.0
  %450 = vmatpush2.msra.mxu0 0.0
  %451 = vmatprep.subr.mxu0 0.0
  %452 = vmatpush2.msra.mxu0 0.0
  %453 = vmatprep.subr.mxu0 0.0
  %454 = vmatpush2.msra.mxu0 0.0
  %455 = vmatprep.subr.mxu0 0.0
  %456 = vmatpush2.msra.mxu0 0.0
  %457 = vmatprep.subr.mxu0 0.0
  %458 = vmatpush2.msra.mxu0 0.0
  %459 = vmatprep.subr.mxu0 0.0
  %460 = vmatpush2.msra.mxu0 0.0
  %461 = vmatprep.subr.mxu0 0.0
  %462 = vmatpush2.msra.mxu0 0.0
  %463 = vmatprep.subr.mxu0 0.0
  %464 = vmatpush2.msra.mxu0 0.0
  %465 = vmatprep.subr.mxu0 0.0
  %466 = vmatpush2.msra.mxu0 0.0
  %467 = vmatprep.subr.mxu0 0.0
  %468 = vmatpush2.msra.mxu0 0.0
  %469 = vmatprep.subr.mxu0 0.0
  %470 = vmatpush2.msra.mxu0 0.0
  %471 = vmatprep.subr.mxu0 0.0
  %472 = vmatpush2.msra.mxu0 0.0
  %473 = vmatprep.subr.mxu0 0.0
  %474 = vmatpush2.msra.mxu0 0.0
  %475 = vmatprep.subr.mxu0 0.0
  %476 = vmatpush2.msra.mxu0 0.0
  %477 = vmatprep.subr.mxu0 0.0
  %478 = vmatpush2.msra.mxu0 0.0
  %479 = vmatprep.mubr.f32.mxu0 0.0
  %480 = vmatmul.mubr.f32.gmra.mxu0 %v413
  %v481 = vpop.f32.mrf.mxu0
  %v482 = vadd.f32 0.0, %v481
  %v483 = vpop.f32.mrf.mxu0
  %484 = vdwg.mxu0
  %v485 = vlaneseq
  %v486 = vshrl.u32 %v485, 7
  %v487 = vsub.s32 0, %v486
  %v488 = vrot.slane %v409, %v487
  %v489 = vmul.f32 %v133, %v488
  %v490 = vmul.f32 %v136, %v488
  %v491 = vmul.f32 %v141, %v488
  %v492 = vmul.f32 %v144, %v488
  %v493 = vlaneseq
  %v494 = vshrl.u32 %v493, 7
  %v495 = vsub.s32 0, %v494
  %v496 = vrot.slane %v482, %v495
  %v497 = vadd.f32 %v489, %v496
  %v498 = vadd.f32 %v490, %v496
  %v499 = vadd.f32 %v491, %v496
  %v500 = vadd.f32 %v492, %v496
  %v501 = vmul.f32 %v497, 0.1
  %v502 = vmul.f32 %v498, 0.1
  %v503 = vmul.f32 %v499, 0.1
  %v504 = vmul.f32 %v500, 0.1
  %v505 = vmax.f32 %v497, %v501
  %v506 = vmax.f32 %v498, %v502
  %v507 = vmax.f32 %v499, %v503
  %v508 = vmax.f32 %v500, %v504
  %v509 = vpack.c.bf16 %v506, %v505
  %v510 = vpack.c.bf16 %v508, %v507
  %v511 = vld [vmem:[%s3] sm:$0xf]
  %v512 = vld [vmem:[%s3 + $0x4] sm:$0xf]
  %v513 = vld [vmem:[%s3 + $0x8] sm:$0xf]
  %v514 = vld [vmem:[%s3 + $0xc] sm:$0xf]
  %v519 = vunpack.c.l.b16 %v511
  %v520 = vunpack.c.l.b16 %v512
  %v521 = vunpack.c.l.b16 %v513
  %v522 = vunpack.c.l.b16 %v514
  %v523 = vpack.c.b16 %v520, %v519
  %v524 = vpack.c.b16 %v522, %v521
  %vm525 = vcmask 261120
  %v527 = vsel %vm525, %v523, 0
  %v530 = vsel %vm525, %v524, 0
  %532 = vmatprep.subr.bf16.mxu0 0
  %533 = vmatpush1.bf16.msra.mxu0 0
  %534 = vmatprep.subr.bf16.mxu0 0
  %535 = vmatpush1.bf16.msra.mxu0 0
  %536 = vmatprep.subr.bf16.mxu0 0
  %537 = vmatpush1.bf16.msra.mxu0 0
  %538 = vmatprep.subr.bf16.mxu0 0
  %539 = vmatpush1.bf16.msra.mxu0 0
  %540 = vmatprep.subr.bf16.mxu0 0
  %541 = vmatpush1.bf16.msra.mxu0 0
  %542 = vmatprep.subr.bf16.mxu0 0
  %543 = vmatpush1.bf16.msra.mxu0 0
  %544 = vmatprep.subr.bf16.mxu0 0
  %545 = vmatpush1.bf16.msra.mxu0 %v510
  %546 = vmatprep.subr.bf16.mxu0 0
  %547 = vmatpush1.bf16.msra.mxu0 %v509
  %548 = vmatprep.subr.bf16.mxu0 0
  %549 = vmatpush2.bf16.msra.mxu0 0
  %550 = vmatprep.subr.bf16.mxu0 0
  %551 = vmatpush2.bf16.msra.mxu0 0
  %552 = vmatprep.subr.bf16.mxu0 0
  %553 = vmatpush2.bf16.msra.mxu0 0
  %554 = vmatprep.subr.bf16.mxu0 0
  %555 = vmatpush2.bf16.msra.mxu0 0
  %556 = vmatprep.subr.bf16.mxu0 0
  %557 = vmatpush2.bf16.msra.mxu0 0
  %558 = vmatprep.subr.bf16.mxu0 0
  %559 = vmatpush2.bf16.msra.mxu0 0
  %560 = vmatprep.subr.bf16.mxu0 0
  %561 = vmatpush2.bf16.msra.mxu0 0
  %562 = vmatprep.subr.bf16.mxu0 0
  %563 = vmatpush2.bf16.msra.mxu0 0
  %564 = vmatprep.mubr.bf16.mxu0 0
  %565 = vmatmul.mubr.bf16.gmra.mxu0 %v527
  %v566 = vpop.f32.mrf.mxu0
  %v567 = vadd.f32 0.0, %v566
  %v568 = vpop.f32.mrf.mxu0
  %v569 = vpop.f32.mrf.mxu0
  %v570 = vadd.f32 0.0, %v569
  %v571 = vpop.f32.mrf.mxu0
  %572 = vmatprep.mubr.bf16.mxu0 0
  %573 = vmatmul.mubr.bf16.gmra.mxu0 %v530
  %v574 = vpop.f32.mrf.mxu0
  %v575 = vadd.f32 0.0, %v574
  %v576 = vpop.f32.mrf.mxu0
  %v577 = vpop.f32.mrf.mxu0
  %v578 = vadd.f32 0.0, %v577
  %v579 = vpop.f32.mrf.mxu0
  %580 = vdwg.mxu0
  %v581 = vpack.c.bf16 %v570, %v567
  %v582 = vpack.c.bf16 %v578, %v575
  %v583 = vld [vmem:[%s4] sm:$0xf]
  %v584 = vld [vmem:[%s4 + $0x4] sm:$0xf]
  %v585 = vld [vmem:[%s4 + $0x8] sm:$0xf]
  %v586 = vld [vmem:[%s4 + $0xc] sm:$0xf]
  %v591 = vunpack.c.l.b16 %v583
  %v592 = vunpack.c.l.b16 %v584
  %v593 = vunpack.c.l.b16 %v585
  %v594 = vunpack.c.l.b16 %v586
  %v595 = vpack.c.b16 %v592, %v591
  %v596 = vpack.c.b16 %v594, %v593
  %v598 = vsel %vm525, %v595, 0
  %v601 = vsel %vm525, %v596, 0
  %603 = vmatprep.subr.bf16.mxu0 0
  %604 = vmatpush1.bf16.msra.mxu0 0
  %605 = vmatprep.subr.bf16.mxu0 0
  %606 = vmatpush1.bf16.msra.mxu0 0
  %607 = vmatprep.subr.bf16.mxu0 0
  %608 = vmatpush1.bf16.msra.mxu0 0
  %609 = vmatprep.subr.bf16.mxu0 0
  %610 = vmatpush1.bf16.msra.mxu0 0
  %611 = vmatprep.subr.bf16.mxu0 0
  %612 = vmatpush1.bf16.msra.mxu0 0
  %613 = vmatprep.subr.bf16.mxu0 0
  %614 = vmatpush1.bf16.msra.mxu0 0
  %615 = vmatprep.subr.bf16.mxu0 0
  %616 = vmatpush1.bf16.msra.mxu0 %v510
  %617 = vmatprep.subr.bf16.mxu0 0
  %618 = vmatpush1.bf16.msra.mxu0 %v509
  %619 = vmatprep.subr.bf16.mxu0 0
  %620 = vmatpush2.bf16.msra.mxu0 0
  %621 = vmatprep.subr.bf16.mxu0 0
  %622 = vmatpush2.bf16.msra.mxu0 0
  %623 = vmatprep.subr.bf16.mxu0 0
  %624 = vmatpush2.bf16.msra.mxu0 0
  %625 = vmatprep.subr.bf16.mxu0 0
  %626 = vmatpush2.bf16.msra.mxu0 0
  %627 = vmatprep.subr.bf16.mxu0 0
  %628 = vmatpush2.bf16.msra.mxu0 0
  %629 = vmatprep.subr.bf16.mxu0 0
  %630 = vmatpush2.bf16.msra.mxu0 0
  %631 = vmatprep.subr.bf16.mxu0 0
  %632 = vmatpush2.bf16.msra.mxu0 0
  %633 = vmatprep.subr.bf16.mxu0 0
  %634 = vmatpush2.bf16.msra.mxu0 0
  %635 = vmatprep.mubr.bf16.mxu0 0
  %636 = vmatmul.mubr.bf16.gmra.mxu0 %v598
  %v637 = vpop.f32.mrf.mxu0
  %v638 = vadd.f32 0.0, %v637
  %v639 = vpop.f32.mrf.mxu0
  %v640 = vpop.f32.mrf.mxu0
  %v641 = vadd.f32 0.0, %v640
  %v642 = vpop.f32.mrf.mxu0
  %643 = vmatprep.mubr.bf16.mxu0 0
  %644 = vmatmul.mubr.bf16.gmra.mxu0 %v601
  %v645 = vpop.f32.mrf.mxu0
  %v646 = vadd.f32 0.0, %v645
  %v647 = vpop.f32.mrf.mxu0
  %v648 = vpop.f32.mrf.mxu0
  %v649 = vadd.f32 0.0, %v648
  %v650 = vpop.f32.mrf.mxu0
  %651 = vdwg.mxu0
  %v652 = vpack.c.bf16 %v641, %v638
  %v653 = vpack.c.bf16 %v649, %v646
  %v654 = vld [vmem:[%s2] sm:$0xf]
  %v655 = vld [vmem:[%s2 + $0x4] sm:$0xf]
  %v656 = vld [vmem:[%s2 + $0x8] sm:$0xf]
  %v657 = vld [vmem:[%s2 + $0xc] sm:$0xf]
  %v658 = vld [vmem:[%s2 + $0x10] sm:$0xf]
  %v659 = vld [vmem:[%s2 + $0x14] sm:$0xf]
  %v660 = vld [vmem:[%s2 + $0x18] sm:$0xf]
  %v661 = vld [vmem:[%s2 + $0x1c] sm:$0xf]
  %v662 = vld [vmem:[%s2 + $0x20] sm:$0xf]
  %v663 = vld [vmem:[%s2 + $0x24] sm:$0xf]
  %v664 = vld [vmem:[%s2 + $0x28] sm:$0xf]
  %v665 = vld [vmem:[%s2 + $0x2c] sm:$0xf]
  %v666 = vld [vmem:[%s2 + $0x30] sm:$0xf]
  %v667 = vld [vmem:[%s2 + $0x34] sm:$0xf]
  %v668 = vld [vmem:[%s2 + $0x38] sm:$0xf]
  %v669 = vld [vmem:[%s2 + $0x3c] sm:$0xf]
  %v670 = vld [vmem:[%s2 + $0x40] sm:$0xf]
  %v671 = vld [vmem:[%s2 + $0x44] sm:$0xf]
  %v672 = vld [vmem:[%s2 + $0x48] sm:$0xf]
  %v673 = vld [vmem:[%s2 + $0x4c] sm:$0xf]
  %v674 = vld [vmem:[%s2 + $0x50] sm:$0xf]
  %v675 = vld [vmem:[%s2 + $0x54] sm:$0xf]
  %v676 = vld [vmem:[%s2 + $0x58] sm:$0xf]
  %v677 = vld [vmem:[%s2 + $0x5c] sm:$0xf]
  %v678 = vld [vmem:[%s2 + $0x60] sm:$0xf]
  %v679 = vld [vmem:[%s2 + $0x64] sm:$0xf]
  %v680 = vld [vmem:[%s2 + $0x68] sm:$0xf]
  %v681 = vld [vmem:[%s2 + $0x6c] sm:$0xf]
  %v682 = vld [vmem:[%s2 + $0x70] sm:$0xf]
  %v683 = vld [vmem:[%s2 + $0x74] sm:$0xf]
  %v684 = vld [vmem:[%s2 + $0x78] sm:$0xf]
  %v685 = vld [vmem:[%s2 + $0x7c] sm:$0xf]
  %v686 = vld [vmem:[%s2 + $0x80] sm:$0xf]
  %v687 = vld [vmem:[%s2 + $0x84] sm:$0xf]
  %v688 = vld [vmem:[%s2 + $0x88] sm:$0xf]
  %v689 = vld [vmem:[%s2 + $0x8c] sm:$0xf]
  %v690 = vld [vmem:[%s2 + $0x90] sm:$0xf]
  %v691 = vld [vmem:[%s2 + $0x94] sm:$0xf]
  %v692 = vld [vmem:[%s2 + $0x98] sm:$0xf]
  %v693 = vld [vmem:[%s2 + $0x9c] sm:$0xf]
  %v694 = vld [vmem:[%s2 + $0xa0] sm:$0xf]
  %v695 = vld [vmem:[%s2 + $0xa4] sm:$0xf]
  %v696 = vld [vmem:[%s2 + $0xa8] sm:$0xf]
  %v697 = vld [vmem:[%s2 + $0xac] sm:$0xf]
  %v698 = vld [vmem:[%s2 + $0xb0] sm:$0xf]
  %v699 = vld [vmem:[%s2 + $0xb4] sm:$0xf]
  %v700 = vld [vmem:[%s2 + $0xb8] sm:$0xf]
  %v701 = vld [vmem:[%s2 + $0xbc] sm:$0xf]
  %v750 = vunpack.c.l.b16 %v654
  %v751 = vunpack.c.l.b16 %v655
  %v752 = vunpack.c.l.b16 %v656
  %v753 = vunpack.c.l.b16 %v657
  %v754 = vunpack.c.l.b16 %v658
  %v755 = vunpack.c.l.b16 %v659
  %v756 = vunpack.c.l.b16 %v660
  %v757 = vunpack.c.l.b16 %v661
  %v758 = vunpack.c.l.b16 %v662
  %v759 = vunpack.c.l.b16 %v663
  %v760 = vunpack.c.l.b16 %v664
  %v761 = vunpack.c.l.b16 %v665
  %v762 = vunpack.c.l.b16 %v666
  %v763 = vunpack.c.l.b16 %v667
  %v764 = vunpack.c.l.b16 %v668
  %v765 = vunpack.c.l.b16 %v669
  %v766 = vunpack.c.l.b16 %v670
  %v767 = vunpack.c.l.b16 %v671
  %v768 = vunpack.c.l.b16 %v672
  %v769 = vunpack.c.l.b16 %v673
  %v770 = vunpack.c.l.b16 %v674
  %v771 = vunpack.c.l.b16 %v675
  %v772 = vunpack.c.l.b16 %v676
  %v773 = vunpack.c.l.b16 %v677
  %v774 = vunpack.c.l.b16 %v678
  %v775 = vunpack.c.l.b16 %v679
  %v776 = vunpack.c.l.b16 %v680
  %v777 = vunpack.c.l.b16 %v681
  %v778 = vunpack.c.l.b16 %v682
  %v779 = vunpack.c.l.b16 %v683
  %v780 = vunpack.c.l.b16 %v684
  %v781 = vunpack.c.l.b16 %v685
  %v782 = vunpack.c.l.b16 %v686
  %v783 = vunpack.c.l.b16 %v687
  %v784 = vunpack.c.l.b16 %v688
  %v785 = vunpack.c.l.b16 %v689
  %v786 = vunpack.c.l.b16 %v690
  %v787 = vunpack.c.l.b16 %v691
  %v788 = vunpack.c.l.b16 %v692
  %v789 = vunpack.c.l.b16 %v693
  %v790 = vunpack.c.l.b16 %v694
  %v791 = vunpack.c.l.b16 %v695
  %v792 = vunpack.c.l.b16 %v696
  %v793 = vunpack.c.l.b16 %v697
  %v794 = vunpack.c.l.b16 %v698
  %v795 = vunpack.c.l.b16 %v699
  %v796 = vunpack.c.l.b16 %v700
  %v797 = vunpack.c.l.b16 %v701
  %v798 = vpack.c.b16 %v751, %v750
  %v799 = vpack.c.b16 %v753, %v752
  %v800 = vpack.c.b16 %v755, %v754
  %v801 = vpack.c.b16 %v757, %v756
  %v802 = vpack.c.b16 %v759, %v758
  %v803 = vpack.c.b16 %v761, %v760
  %v804 = vpack.c.b16 %v763, %v762
  %v805 = vpack.c.b16 %v765, %v764
  %v806 = vpack.c.b16 %v767, %v766
  %v807 = vpack.c.b16 %v769, %v768
  %v808 = vpack.c.b16 %v771, %v770
  %v809 = vpack.c.b16 %v773, %v772
  %v810 = vpack.c.b16 %v775, %v774
  %v811 = vpack.c.b16 %v777, %v776
  %v812 = vpack.c.b16 %v779, %v778
  %v813 = vpack.c.b16 %v781, %v780
  %v814 = vpack.c.b16 %v783, %v782
  %v815 = vpack.c.b16 %v785, %v784
  %v816 = vpack.c.b16 %v787, %v786
  %v817 = vpack.c.b16 %v789, %v788
  %v818 = vpack.c.b16 %v791, %v790
  %v819 = vpack.c.b16 %v793, %v792
  %v820 = vpack.c.b16 %v795, %v794
  %v821 = vpack.c.b16 %v797, %v796
  %846 = vmatprep.subr.bf16.mxu0 0
  %847 = vmatpush1.bf16.msra.mxu0 %v805
  %848 = vmatprep.subr.bf16.mxu0 0
  %849 = vmatpush1.bf16.msra.mxu0 %v804
  %850 = vmatprep.subr.bf16.mxu0 0
  %851 = vmatpush1.bf16.msra.mxu0 %v803
  %852 = vmatprep.subr.bf16.mxu0 0
  %853 = vmatpush1.bf16.msra.mxu0 %v802
  %854 = vmatprep.subr.bf16.mxu0 0
  %855 = vmatpush1.bf16.msra.mxu0 %v801
  %856 = vmatprep.subr.bf16.mxu0 0
  %857 = vmatpush1.bf16.msra.mxu0 %v800
  %858 = vmatprep.subr.bf16.mxu0 0
  %859 = vmatpush1.bf16.msra.mxu0 %v799
  %860 = vmatprep.subr.bf16.mxu0 0
  %861 = vmatpush1.bf16.msra.mxu0 %v798
  %862 = vmatprep.subr.bf16.mxu0 0
  %863 = vmatpush2.bf16.msra.mxu0 %v813
  %864 = vmatprep.subr.bf16.mxu0 0
  %865 = vmatpush2.bf16.msra.mxu0 %v812
  %866 = vmatprep.subr.bf16.mxu0 0
  %867 = vmatpush2.bf16.msra.mxu0 %v811
  %868 = vmatprep.subr.bf16.mxu0 0
  %869 = vmatpush2.bf16.msra.mxu0 %v810
  %870 = vmatprep.subr.bf16.mxu0 0
  %871 = vmatpush2.bf16.msra.mxu0 %v809
  %872 = vmatprep.subr.bf16.mxu0 0
  %873 = vmatpush2.bf16.msra.mxu0 %v808
  %874 = vmatprep.subr.bf16.mxu0 0
  %875 = vmatpush2.bf16.msra.mxu0 %v807
  %876 = vmatprep.subr.bf16.mxu0 0
  %877 = vmatpush2.bf16.msra.mxu0 %v806
  %878 = vmatprep.mubr.bf16.mxu0 %v509
  %879 = vmatmul.mubr.bf16.gmra.mxu0 %v581
  %v880 = vpop.f32.mrf.mxu0
  %v881 = vadd.f32 0.0, %v880
  %v882 = vpop.f32.mrf.mxu0
  %v883 = vpop.f32.mrf.mxu0
  %v884 = vadd.f32 0.0, %v883
  %v885 = vpop.f32.mrf.mxu0
  %886 = vmatprep.mubr.bf16.mxu0 %v510
  %887 = vmatmul.mubr.bf16.gmra.mxu0 %v582
  %v888 = vpop.f32.mrf.mxu0
  %v889 = vadd.f32 0.0, %v888
  %v890 = vpop.f32.mrf.mxu0
  %v891 = vpop.f32.mrf.mxu0
  %v892 = vadd.f32 0.0, %v891
  %v893 = vpop.f32.mrf.mxu0
  %894 = vdwg.mxu0
  %895 = vmatprep.subr.bf16.mxu0 0
  %896 = vmatpush1.bf16.msra.mxu0 %v821
  %897 = vmatprep.subr.bf16.mxu0 0
  %898 = vmatpush1.bf16.msra.mxu0 %v820
  %899 = vmatprep.subr.bf16.mxu0 0
  %900 = vmatpush1.bf16.msra.mxu0 %v819
  %901 = vmatprep.subr.bf16.mxu0 0
  %902 = vmatpush1.bf16.msra.mxu0 %v818
  %903 = vmatprep.subr.bf16.mxu0 0
  %904 = vmatpush1.bf16.msra.mxu0 %v817
  %905 = vmatprep.subr.bf16.mxu0 0
  %906 = vmatpush1.bf16.msra.mxu0 %v816
  %907 = vmatprep.subr.bf16.mxu0 0
  %908 = vmatpush1.bf16.msra.mxu0 %v815
  %909 = vmatprep.subr.bf16.mxu0 0
  %910 = vmatpush1.bf16.msra.mxu0 %v814
  %911 = vmatprep.subr.bf16.mxu0 0
  %912 = vmatpush2.bf16.msra.mxu0 0
  %913 = vmatprep.subr.bf16.mxu0 0
  %914 = vmatpush2.bf16.msra.mxu0 0
  %915 = vmatprep.subr.bf16.mxu0 0
  %916 = vmatpush2.bf16.msra.mxu0 0
  %917 = vmatprep.subr.bf16.mxu0 0
  %918 = vmatpush2.bf16.msra.mxu0 0
  %919 = vmatprep.subr.bf16.mxu0 0
  %920 = vmatpush2.bf16.msra.mxu0 0
  %921 = vmatprep.subr.bf16.mxu0 0
  %922 = vmatpush2.bf16.msra.mxu0 0
  %923 = vmatprep.subr.bf16.mxu0 0
  %924 = vmatpush2.bf16.msra.mxu0 0
  %925 = vmatprep.subr.bf16.mxu0 0
  %926 = vmatpush2.bf16.msra.mxu0 0
  %927 = vmatprep.mubr.bf16.mxu0 0
  %928 = vmatmul.mubr.bf16.gmra.mxu0 %v652
  %v929 = vpop.f32.mrf.mxu0
  %v930 = vadd.f32 %v881, %v929
  %v931 = vpop.f32.mrf.mxu0
  %v932 = vpop.f32.mrf.mxu0
  %v933 = vadd.f32 %v884, %v932
  %v934 = vpop.f32.mrf.mxu0
  %935 = vmatprep.mubr.bf16.mxu0 0
  %936 = vmatmul.mubr.bf16.gmra.mxu0 %v653
  %v937 = vpop.f32.mrf.mxu0
  %v938 = vadd.f32 %v889, %v937
  %v939 = vpop.f32.mrf.mxu0
  %v940 = vpop.f32.mrf.mxu0
  %v941 = vadd.f32 %v892, %v940
  %v942 = vpop.f32.mrf.mxu0
  %943 = vdwg.mxu0
  %v944 = vadd.f32 %v930, %v933
  %v945 = vadd.f32 %v944, %v938
  %v946 = vadd.f32 %v945, %v941
  %v947 = vrot.slane %v946, 4
  %v948 = vadd.f32 %v946, %v947
  %v949 = vrot.slane %v948, 2
  %v950 = vadd.f32 %v948, %v949
  %v951 = vrot.slane %v950, 1
  %v952 = vadd.f32 %v950, %v951
  %v953 = vmul.f32 %v930, %v930
  %v954 = vmul.f32 %v933, %v933
  %v955 = vmul.f32 %v938, %v938
  %v956 = vmul.f32 %v941, %v941
  %v957 = vadd.f32 %v953, %v954
  %v958 = vadd.f32 %v957, %v955
  %v959 = vadd.f32 %v958, %v956
  %v960 = vrot.slane %v959, 4
  %v961 = vadd.f32 %v959, %v960
  %v962 = vrot.slane %v961, 2
  %v963 = vadd.f32 %v961, %v962
  %v964 = vrot.slane %v963, 1
  %v965 = vadd.f32 %v963, %v964
  %v966 = vld [vmem:[%s11] sm:$0xff]
  %v967 = vld [vmem:[%s11 + $0x8] sm:$0xff]
  %v968 = vld [vmem:[%s11 + $0x10] sm:$0xff]
  %v969 = vld [vmem:[%s11 + $0x18] sm:$0xff]
  %v970 = vld [vmem:[%s11 + $0x20] sm:$0xff]
  %v971 = vld [vmem:[%s11 + $0x28] sm:$0xff]
  %v972 = vld [vmem:[%s11 + $0x30] sm:$0xff]
  %v973 = vld [vmem:[%s11 + $0x38] sm:$0xff]
  %v974 = vld [vmem:[%s11 + $0x40] sm:$0xff]
  %v975 = vld [vmem:[%s11 + $0x48] sm:$0xff]
  %v976 = vld [vmem:[%s11 + $0x50] sm:$0xff]
  %v977 = vld [vmem:[%s11 + $0x58] sm:$0xff]
  %v978 = vld [vmem:[%s11 + $0x60] sm:$0xff]
  %v979 = vld [vmem:[%s11 + $0x68] sm:$0xff]
  %v980 = vld [vmem:[%s11 + $0x70] sm:$0xff]
  %v981 = vld [vmem:[%s11 + $0x78] sm:$0xff]
  %982 = vmatprep.subr.mxu0 0.0
  %983 = vmatpush1.msra.mxu0 %v981
  %984 = vmatprep.subr.mxu0 0.0
  %985 = vmatpush1.msra.mxu0 %v980
  %986 = vmatprep.subr.mxu0 0.0
  %987 = vmatpush1.msra.mxu0 %v979
  %988 = vmatprep.subr.mxu0 0.0
  %989 = vmatpush1.msra.mxu0 %v978
  %990 = vmatprep.subr.mxu0 0.0
  %991 = vmatpush1.msra.mxu0 %v977
  %992 = vmatprep.subr.mxu0 0.0
  %993 = vmatpush1.msra.mxu0 %v976
  %994 = vmatprep.subr.mxu0 0.0
  %995 = vmatpush1.msra.mxu0 %v975
  %996 = vmatprep.subr.mxu0 0.0
  %997 = vmatpush1.msra.mxu0 %v974
  %998 = vmatprep.subr.mxu0 0.0
  %999 = vmatpush1.msra.mxu0 %v973
  %1000 = vmatprep.subr.mxu0 0.0
  %1001 = vmatpush1.msra.mxu0 %v972
  %1002 = vmatprep.subr.mxu0 0.0
  %1003 = vmatpush1.msra.mxu0 %v971
  %1004 = vmatprep.subr.mxu0 0.0
  %1005 = vmatpush1.msra.mxu0 %v970
  %1006 = vmatprep.subr.mxu0 0.0
  %1007 = vmatpush1.msra.mxu0 %v969
  %1008 = vmatprep.subr.mxu0 0.0
  %1009 = vmatpush1.msra.mxu0 %v968
  %1010 = vmatprep.subr.mxu0 0.0
  %1011 = vmatpush1.msra.mxu0 %v967
  %1012 = vmatprep.subr.mxu0 0.0
  %1013 = vmatpush1.msra.mxu0 %v966
  %1014 = vmatprep.subr.mxu0 0.0
  %1015 = vmatpush2.msra.mxu0 0.0
  %1016 = vmatprep.subr.mxu0 0.0
  %1017 = vmatpush2.msra.mxu0 0.0
  %1018 = vmatprep.subr.mxu0 0.0
  %1019 = vmatpush2.msra.mxu0 0.0
  %1020 = vmatprep.subr.mxu0 0.0
  %1021 = vmatpush2.msra.mxu0 0.0
  %1022 = vmatprep.subr.mxu0 0.0
  %1023 = vmatpush2.msra.mxu0 0.0
  %1024 = vmatprep.subr.mxu0 0.0
  %1025 = vmatpush2.msra.mxu0 0.0
  %1026 = vmatprep.subr.mxu0 0.0
  %1027 = vmatpush2.msra.mxu0 0.0
  %1028 = vmatprep.subr.mxu0 0.0
  %1029 = vmatpush2.msra.mxu0 0.0
  %1030 = vmatprep.subr.mxu0 0.0
  %1031 = vmatpush2.msra.mxu0 0.0
  %1032 = vmatprep.subr.mxu0 0.0
  %1033 = vmatpush2.msra.mxu0 0.0
  %1034 = vmatprep.subr.mxu0 0.0
  %1035 = vmatpush2.msra.mxu0 0.0
  %1036 = vmatprep.subr.mxu0 0.0
  %1037 = vmatpush2.msra.mxu0 0.0
  %1038 = vmatprep.subr.mxu0 0.0
  %1039 = vmatpush2.msra.mxu0 0.0
  %1040 = vmatprep.subr.mxu0 0.0
  %1041 = vmatpush2.msra.mxu0 0.0
  %1042 = vmatprep.subr.mxu0 0.0
  %1043 = vmatpush2.msra.mxu0 0.0
  %1044 = vmatprep.subr.mxu0 0.0
  %1045 = vmatpush2.msra.mxu0 0.0
  %1046 = vmatprep.mubr.f32.mxu0 0.0
  %1047 = vmatmul.mubr.f32.gmra.mxu0 %v952
  %v1048 = vpop.f32.mrf.mxu0
  %v1049 = vadd.f32 0.0, %v1048
  %v1050 = vpop.f32.mrf.mxu0
  %1051 = vdwg.mxu0
  %1052 = vmatprep.subr.mxu0 0.0
  %1053 = vmatpush1.msra.mxu0 %v981
  %1054 = vmatprep.subr.mxu0 0.0
  %1055 = vmatpush1.msra.mxu0 %v980
  %1056 = vmatprep.subr.mxu0 0.0
  %1057 = vmatpush1.msra.mxu0 %v979
  %1058 = vmatprep.subr.mxu0 0.0
  %1059 = vmatpush1.msra.mxu0 %v978
  %1060 = vmatprep.subr.mxu0 0.0
  %1061 = vmatpush1.msra.mxu0 %v977
  %1062 = vmatprep.subr.mxu0 0.0
  %1063 = vmatpush1.msra.mxu0 %v976
  %1064 = vmatprep.subr.mxu0 0.0
  %1065 = vmatpush1.msra.mxu0 %v975
  %1066 = vmatprep.subr.mxu0 0.0
  %1067 = vmatpush1.msra.mxu0 %v974
  %1068 = vmatprep.subr.mxu0 0.0
  %1069 = vmatpush1.msra.mxu0 %v973
  %1070 = vmatprep.subr.mxu0 0.0
  %1071 = vmatpush1.msra.mxu0 %v972
  %1072 = vmatprep.subr.mxu0 0.0
  %1073 = vmatpush1.msra.mxu0 %v971
  %1074 = vmatprep.subr.mxu0 0.0
  %1075 = vmatpush1.msra.mxu0 %v970
  %1076 = vmatprep.subr.mxu0 0.0
  %1077 = vmatpush1.msra.mxu0 %v969
  %1078 = vmatprep.subr.mxu0 0.0
  %1079 = vmatpush1.msra.mxu0 %v968
  %1080 = vmatprep.subr.mxu0 0.0
  %1081 = vmatpush1.msra.mxu0 %v967
  %1082 = vmatprep.subr.mxu0 0.0
  %1083 = vmatpush1.msra.mxu0 %v966
  %1084 = vmatprep.subr.mxu0 0.0
  %1085 = vmatpush2.msra.mxu0 0.0
  %1086 = vmatprep.subr.mxu0 0.0
  %1087 = vmatpush2.msra.mxu0 0.0
  %1088 = vmatprep.subr.mxu0 0.0
  %1089 = vmatpush2.msra.mxu0 0.0
  %1090 = vmatprep.subr.mxu0 0.0
  %1091 = vmatpush2.msra.mxu0 0.0
  %1092 = vmatprep.subr.mxu0 0.0
  %1093 = vmatpush2.msra.mxu0 0.0
  %1094 = vmatprep.subr.mxu0 0.0
  %1095 = vmatpush2.msra.mxu0 0.0
  %1096 = vmatprep.subr.mxu0 0.0
  %1097 = vmatpush2.msra.mxu0 0.0
  %1098 = vmatprep.subr.mxu0 0.0
  %1099 = vmatpush2.msra.mxu0 0.0
  %1100 = vmatprep.subr.mxu0 0.0
  %1101 = vmatpush2.msra.mxu0 0.0
  %1102 = vmatprep.subr.mxu0 0.0
  %1103 = vmatpush2.msra.mxu0 0.0
  %1104 = vmatprep.subr.mxu0 0.0
  %1105 = vmatpush2.msra.mxu0 0.0
  %1106 = vmatprep.subr.mxu0 0.0
  %1107 = vmatpush2.msra.mxu0 0.0
  %1108 = vmatprep.subr.mxu0 0.0
  %1109 = vmatpush2.msra.mxu0 0.0
  %1110 = vmatprep.subr.mxu0 0.0
  %1111 = vmatpush2.msra.mxu0 0.0
  %1112 = vmatprep.subr.mxu0 0.0
  %1113 = vmatpush2.msra.mxu0 0.0
  %1114 = vmatprep.subr.mxu0 0.0
  %1115 = vmatpush2.msra.mxu0 0.0
  %1116 = vmatprep.mubr.f32.mxu0 0.0
  %1117 = vmatmul.mubr.f32.gmra.mxu0 %v965
  %v1118 = vpop.f32.mrf.mxu0
  %v1119 = vadd.f32 0.0, %v1118
  %v1120 = vpop.f32.mrf.mxu0
  %1121 = vdwg.mxu0
  %v1122 = vmul.f32 %v1049, 0.001953125
  %v1123 = vmul.f32 %v1119, 0.001953125
  %v1124 = vmul.f32 %v1122, %v1122
  %v1125 = vsub.f32 %v1123, %v1124
  %v1126 = vmax.f32 %v1125, 0.0
  %v1127 = vld [vmem:[%s7] sm:$0x1]
  %v1128 = vadd.f32 %v1126, 1e-05
  %v1129 = vrsqrt.pop %v1128
  %v1130 = vmul.f32 %v1127, %v1129
  %v1131 = vld [vmem:[%s8] sm:$0x1]
  %v1132 = vmul.f32 %v1122, %v1130
  %v1133 = vsub.f32 %v1131, %v1132
  %v1134 = vld [vmem:[%s12] sm:$0xff]
  %v1136 = vsel %vm338, %v1130, 0
  %1138 = vmatprep.subr.mxu0 0.0
  %1139 = vmatpush1.msra.mxu0 0.0
  %1140 = vmatprep.subr.mxu0 0.0
  %1141 = vmatpush1.msra.mxu0 0.0
  %1142 = vmatprep.subr.mxu0 0.0
  %1143 = vmatpush1.msra.mxu0 0.0
  %1144 = vmatprep.subr.mxu0 0.0
  %1145 = vmatpush1.msra.mxu0 0.0
  %1146 = vmatprep.subr.mxu0 0.0
  %1147 = vmatpush1.msra.mxu0 0.0
  %1148 = vmatprep.subr.mxu0 0.0
  %1149 = vmatpush1.msra.mxu0 0.0
  %1150 = vmatprep.subr.mxu0 0.0
  %1151 = vmatpush1.msra.mxu0 0.0
  %1152 = vmatprep.subr.mxu0 0.0
  %1153 = vmatpush1.msra.mxu0 0.0
  %1154 = vmatprep.subr.mxu0 0.0
  %1155 = vmatpush1.msra.mxu0 0.0
  %1156 = vmatprep.subr.mxu0 0.0
  %1157 = vmatpush1.msra.mxu0 0.0
  %1158 = vmatprep.subr.mxu0 0.0
  %1159 = vmatpush1.msra.mxu0 0.0
  %1160 = vmatprep.subr.mxu0 0.0
  %1161 = vmatpush1.msra.mxu0 0.0
  %1162 = vmatprep.subr.mxu0 0.0
  %1163 = vmatpush1.msra.mxu0 0.0
  %1164 = vmatprep.subr.mxu0 0.0
  %1165 = vmatpush1.msra.mxu0 0.0
  %1166 = vmatprep.subr.mxu0 0.0
  %1167 = vmatpush1.msra.mxu0 0.0
  %1168 = vmatprep.subr.mxu0 0.0
  %1169 = vmatpush1.msra.mxu0 %v1134
  %1170 = vmatprep.subr.mxu0 0.0
  %1171 = vmatpush2.msra.mxu0 0.0
  %1172 = vmatprep.subr.mxu0 0.0
  %1173 = vmatpush2.msra.mxu0 0.0
  %1174 = vmatprep.subr.mxu0 0.0
  %1175 = vmatpush2.msra.mxu0 0.0
  %1176 = vmatprep.subr.mxu0 0.0
  %1177 = vmatpush2.msra.mxu0 0.0
  %1178 = vmatprep.subr.mxu0 0.0
  %1179 = vmatpush2.msra.mxu0 0.0
  %1180 = vmatprep.subr.mxu0 0.0
  %1181 = vmatpush2.msra.mxu0 0.0
  %1182 = vmatprep.subr.mxu0 0.0
  %1183 = vmatpush2.msra.mxu0 0.0
  %1184 = vmatprep.subr.mxu0 0.0
  %1185 = vmatpush2.msra.mxu0 0.0
  %1186 = vmatprep.subr.mxu0 0.0
  %1187 = vmatpush2.msra.mxu0 0.0
  %1188 = vmatprep.subr.mxu0 0.0
  %1189 = vmatpush2.msra.mxu0 0.0
  %1190 = vmatprep.subr.mxu0 0.0
  %1191 = vmatpush2.msra.mxu0 0.0
  %1192 = vmatprep.subr.mxu0 0.0
  %1193 = vmatpush2.msra.mxu0 0.0
  %1194 = vmatprep.subr.mxu0 0.0
  %1195 = vmatpush2.msra.mxu0 0.0
  %1196 = vmatprep.subr.mxu0 0.0
  %1197 = vmatpush2.msra.mxu0 0.0
  %1198 = vmatprep.subr.mxu0 0.0
  %1199 = vmatpush2.msra.mxu0 0.0
  %1200 = vmatprep.subr.mxu0 0.0
  %1201 = vmatpush2.msra.mxu0 0.0
  %1202 = vmatprep.mubr.f32.mxu0 0.0
  %1203 = vmatmul.mubr.f32.gmra.mxu0 %v1136
  %v1204 = vpop.f32.mrf.mxu0
  %v1205 = vadd.f32 0.0, %v1204
  %v1206 = vpop.f32.mrf.mxu0
  %1207 = vdwg.mxu0
  %v1209 = vsel %vm338, %v1133, 0
  %1211 = vmatprep.subr.mxu0 0.0
  %1212 = vmatpush1.msra.mxu0 0.0
  %1213 = vmatprep.subr.mxu0 0.0
  %1214 = vmatpush1.msra.mxu0 0.0
  %1215 = vmatprep.subr.mxu0 0.0
  %1216 = vmatpush1.msra.mxu0 0.0
  %1217 = vmatprep.subr.mxu0 0.0
  %1218 = vmatpush1.msra.mxu0 0.0
  %1219 = vmatprep.subr.mxu0 0.0
  %1220 = vmatpush1.msra.mxu0 0.0
  %1221 = vmatprep.subr.mxu0 0.0
  %1222 = vmatpush1.msra.mxu0 0.0
  %1223 = vmatprep.subr.mxu0 0.0
  %1224 = vmatpush1.msra.mxu0 0.0
  %1225 = vmatprep.subr.mxu0 0.0
  %1226 = vmatpush1.msra.mxu0 0.0
  %1227 = vmatprep.subr.mxu0 0.0
  %1228 = vmatpush1.msra.mxu0 0.0
  %1229 = vmatprep.subr.mxu0 0.0
  %1230 = vmatpush1.msra.mxu0 0.0
  %1231 = vmatprep.subr.mxu0 0.0
  %1232 = vmatpush1.msra.mxu0 0.0
  %1233 = vmatprep.subr.mxu0 0.0
  %1234 = vmatpush1.msra.mxu0 0.0
  %1235 = vmatprep.subr.mxu0 0.0
  %1236 = vmatpush1.msra.mxu0 0.0
  %1237 = vmatprep.subr.mxu0 0.0
  %1238 = vmatpush1.msra.mxu0 0.0
  %1239 = vmatprep.subr.mxu0 0.0
  %1240 = vmatpush1.msra.mxu0 0.0
  %1241 = vmatprep.subr.mxu0 0.0
  %1242 = vmatpush1.msra.mxu0 %v1134
  %1243 = vmatprep.subr.mxu0 0.0
  %1244 = vmatpush2.msra.mxu0 0.0
  %1245 = vmatprep.subr.mxu0 0.0
  %1246 = vmatpush2.msra.mxu0 0.0
  %1247 = vmatprep.subr.mxu0 0.0
  %1248 = vmatpush2.msra.mxu0 0.0
  %1249 = vmatprep.subr.mxu0 0.0
  %1250 = vmatpush2.msra.mxu0 0.0
  %1251 = vmatprep.subr.mxu0 0.0
  %1252 = vmatpush2.msra.mxu0 0.0
  %1253 = vmatprep.subr.mxu0 0.0
  %1254 = vmatpush2.msra.mxu0 0.0
  %1255 = vmatprep.subr.mxu0 0.0
  %1256 = vmatpush2.msra.mxu0 0.0
  %1257 = vmatprep.subr.mxu0 0.0
  %1258 = vmatpush2.msra.mxu0 0.0
  %1259 = vmatprep.subr.mxu0 0.0
  %1260 = vmatpush2.msra.mxu0 0.0
  %1261 = vmatprep.subr.mxu0 0.0
  %1262 = vmatpush2.msra.mxu0 0.0
  %1263 = vmatprep.subr.mxu0 0.0
  %1264 = vmatpush2.msra.mxu0 0.0
  %1265 = vmatprep.subr.mxu0 0.0
  %1266 = vmatpush2.msra.mxu0 0.0
  %1267 = vmatprep.subr.mxu0 0.0
  %1268 = vmatpush2.msra.mxu0 0.0
  %1269 = vmatprep.subr.mxu0 0.0
  %1270 = vmatpush2.msra.mxu0 0.0
  %1271 = vmatprep.subr.mxu0 0.0
  %1272 = vmatpush2.msra.mxu0 0.0
  %1273 = vmatprep.subr.mxu0 0.0
  %1274 = vmatpush2.msra.mxu0 0.0
  %1275 = vmatprep.mubr.f32.mxu0 0.0
  %1276 = vmatmul.mubr.f32.gmra.mxu0 %v1209
  %v1277 = vpop.f32.mrf.mxu0
  %v1278 = vadd.f32 0.0, %v1277
  %v1279 = vpop.f32.mrf.mxu0
  %1280 = vdwg.mxu0
  %v1281 = vlaneseq
  %v1282 = vshrl.u32 %v1281, 7
  %v1283 = vsub.s32 0, %v1282
  %v1284 = vrot.slane %v1205, %v1283
  %v1285 = vmul.f32 %v930, %v1284
  %v1286 = vmul.f32 %v933, %v1284
  %v1287 = vmul.f32 %v938, %v1284
  %v1288 = vmul.f32 %v941, %v1284
  %v1289 = vlaneseq
  %v1290 = vshrl.u32 %v1289, 7
  %v1291 = vsub.s32 0, %v1290
  %v1292 = vrot.slane %v1278, %v1291
  %v1293 = vadd.f32 %v1285, %v1292
  %v1294 = vadd.f32 %v1286, %v1292
  %v1295 = vadd.f32 %v1287, %v1292
  %v1296 = vadd.f32 %v1288, %v1292
  %v1297 = vmul.f32 %v1293, 0.1
  %v1298 = vmul.f32 %v1294, 0.1
  %v1299 = vmul.f32 %v1295, 0.1
  %v1300 = vmul.f32 %v1296, 0.1
  %v1301 = vmax.f32 %v1293, %v1297
  %v1302 = vmax.f32 %v1294, %v1298
  %v1303 = vmax.f32 %v1295, %v1299
  %v1304 = vmax.f32 %v1296, %v1300
  %1305 = vst [vmem:[%s13] sm:$0xff] %v1301
  %1306 = vst [vmem:[%s13 + $0x8] sm:$0xff] %v1302
  %1307 = vst [vmem:[%s13 + $0x10] sm:$0xff] %v1303
  %1308 = vst [vmem:[%s13 + $0x18] sm:$0xff] %v1304
  // Predicated region
  $region54: #{double_conv_batch.1} parent=0 // pred_check
    _
  $region55: #{double_conv_batch.1} parent=0 // pred_check_branch
    %1310 = sbr.rel (0) target = $region57
  $region56: #{double_conv_batch.1} parent=0 // pred_region
    _
  $region57: #{double_conv_batch.1} parent=0 // pred_fallthru
    _
  // Predicated region
  $region58: #{double_conv_batch.1} parent=0 // pred_check
    _
  $region59: #{double_conv_batch.1} parent=0 // pred_check_branch
    %1312 = sbr.rel (0) target = $region61
  $region60: #{double_conv_batch.1} parent=0 // pred_region
    _
  $region61: #{double_conv_batch.1} parent=0 // pred_fallthru
    _

</llo_original>
